<compile_context>
chip_gen: v5e
topology: v5e:2x2
jax: 0.10.0
libtpu: 0.0.40
codegen_flags: <defaults>
</compile_context>

<pallas_src>
import functools

import jax
import jax.numpy as jnp
from jax import lax
from jax.experimental import pallas as pl
from jax.experimental.pallas import tpu as pltpu


# --------------------------------------------------------------------------- #
# Small host-side TPU-generation helpers (used only for perf knobs)
# --------------------------------------------------------------------------- #
def _tpu_kind():
    try:
        return jax.devices()[0].device_kind.lower()
    except Exception:
        return ""


def _bf16_eup_ok(kind):
    # bf16 EUP/VPU path exists on v6e and newer; absent on v5e and older.
    if not kind:
        return False
    return not any(old in kind for old in ("v2", "v3", "v4", "v5"))


def _is_v7x(kind):
    return ("v7" in kind) or ("7x" in kind)


# --------------------------------------------------------------------------- #
# Pallas kernel: SAGAN self-attention, grid = (batch, query-tile)
# --------------------------------------------------------------------------- #
def _self_attn_kernel(x_ref, w_ref, b_ref, gamma_ref, out_ref, scr_ref, u_ref,
                      *, bf16_exp):
    """One (batch, query-tile) grid step.

    x_ref     : (1, C, N)     input, channels-first, N = H*W on lanes (f32)
    w_ref     : (2C+8, C)     bf16 fused weight: [Wq^T Wk ; Wv ; Wk^T bq ; 0-pad]
    b_ref     : (2C+8, 1)     f32 fused bias (only the Wv rows carry bv)
    gamma_ref : (1,) in SMEM  residual scale (scalar)
    out_ref   : (1, C, tq)    output tile (query positions on lanes)
    scr_ref   : (2C, N) bf16  per-batch scratch: rows [0,C) = (Wq^T Wk) X,
                              rows [C,2C) = V = Wv X + bv
    u_ref     : (1, N) f32    per-batch key-bias term u_j = (Wk^T bq).x_j
    """
    C = x_ref.shape[1]
    tq = out_ref.shape[2]
    qt = pl.program_id(1)

    # NOTE: caching the per-batch projection in persistent scratch at qt==0 is
    # only valid because the query-tile axis is the innermost, sequential
    # ("arbitrary") grid axis and the batch axis is the outer one.  Do not flip
    # the grid order or mark the qt axis parallel / core-split.
    @pl.when(qt == 0)
    def _():
        xb = x_ref[0].astype(jnp.bfloat16)                         # (C, N)
        proj = lax.dot_general(
            w_ref[...], xb, (((1,), (0,)), ((), ())),
            preferred_element_type=jnp.float32) + b_ref[...]       # (2C+8, N) f32
        scr_ref[...] = proj[: 2 * C, :].astype(jnp.bfloat16)       # [A@X ; V]
        u_ref[...] = proj[2 * C: 2 * C + 1, :]                     # (1, N)

    start = pl.multiple_of(qt * tq, tq)
    x_tile = x_ref[0, :, pl.ds(start, tq)]                         # (C, tq) f32

    # energy[i, j] = <q_i, k_j>  (row-constant bias terms dropped -- they cancel
    # in softmax(dim=-1)).  Folded form: x_tile^T (Wq^T Wk) X  -> 128-deep MXU
    # contraction instead of the 16-deep q^T k one.
    ax = scr_ref[pl.ds(0, C), :]                                   # (C, N) bf16
    energy = lax.dot_general(
        x_tile.astype(jnp.bfloat16), ax, (((0,), (0,)), ((), ())),
        preferred_element_type=jnp.float32)                        # (tq, N) f32
    energy = energy + u_ref[...]                                   # + (Wk^T bq).x_j

    # numerically-stable softmax over the key axis (== nn.Softmax(dim=-1));
    # max-subtraction / row-sum / reciprocal stay in f32.
    z = energy - jnp.max(energy, axis=-1, keepdims=True)
    if bf16_exp:                                   # v6e/v7x: bf16 EUP (~2x exp)
        p = jnp.exp(z.astype(jnp.bfloat16))
    else:                                          # v5e and older: no bf16 EUP
        p = jnp.exp(z)
    l = jnp.sum(p.astype(jnp.float32), axis=-1, keepdims=True)     # (tq, 1)
    attn = (p * pl.reciprocal(l, approx=True)).astype(jnp.bfloat16)

    # out[c, i] = sum_j v[c, j] * attn[i, j]  == torch.bmm(v, attn^T)
    v = scr_ref[pl.ds(C, C), :]                                    # (C, N) bf16
    pv = lax.dot_general(v, attn, (((1,), (1,)), ((), ())),
                         preferred_element_type=jnp.float32)       # (C, tq) f32

    out_ref[0] = gamma_ref[0] * pv + x_tile


def self_attention_pallas(x_nchw, wq, bq, wk, bk, wv, bv, gamma, *, tq=None):
    """SAGAN self-attention.  x_nchw: (B, C, H, W) f32.  Conv weights torch-shaped:
    wq/wk: (C//8, C, 1, 1), wv: (C, C, 1, 1); biases (C//8,)/(C,); gamma: (1,)."""
    B, C, H, W = x_nchw.shape
    C8 = wq.shape[0]
    N = H * W
    kind = _tpu_kind()

    if tq is None:
        if N % 128 != 0:
            # TODO(synk): pad N up to a multiple of 128 so stores stay lane-dense.
            tq = N
        elif _is_v7x(kind) and N >= 8192:
            tq = 128            # v7x has only 64 MiB VMEM: keep (tq, N) tiles small
        elif N % 256 == 0:
            tq = 256
        else:
            tq = 128
    tq = min(tq, N)
    assert N % tq == 0, (N, tq)

    # channels-first, spatial flattened onto the lane axis -- NO transposes.
    x_bcn = x_nchw.reshape(B, C, N).astype(jnp.float32)

    # Host-side weight folding (f32, then bf16 for the MXU):
    #   A   = Wq^T Wk            (C, C)   -> energy contraction depth C
    #   Wv                        (C, C)
    #   u_w = Wk^T bq             (1, C)   -> key-side bias row of the energy
    # (query-side bias and bq.bk are constant along the softmax axis and cancel)
    wq2 = wq.reshape(C8, C).astype(jnp.float32)
    wk2 = wk.reshape(C8, C).astype(jnp.float32)
    wv2 = wv.reshape(C, C).astype(jnp.float32)
    a_fold = wq2.T @ wk2
    u_w = (wk2.T @ bq.astype(jnp.float32)).reshape(1, C)
    pad = jnp.zeros((7, C), jnp.float32)               # pad rows -> multiple of 8
    w_full = jnp.concatenate([a_fold, wv2, u_w, pad], axis=0).astype(jnp.bfloat16)
    b_full = jnp.concatenate(
        [jnp.zeros((C,), jnp.float32), bv.astype(jnp.float32),
         jnp.zeros((8,), jnp.float32)]).reshape(2 * C + 8, 1)
    gamma_s = gamma.reshape((1,)).astype(jnp.float32)

    kernel = functools.partial(_self_attn_kernel, bf16_exp=_bf16_eup_ok(kind))

    # TODO(synk): for v5e with tiny B*N (grid of ~4 steps) fold the batch dim into
    # one block to cut per-step overhead; for v7x with B==1 split the query-tile
    # axis across the two TensorCores (re-doing the projection per core).
    out_bcn = pl.pallas_call(
        kernel,
        out_shape=jax.ShapeDtypeStruct((B, C, N), jnp.float32),
        grid_spec=pltpu.PrefetchScalarGridSpec(
            num_scalar_prefetch=0,
            grid=(B, N // tq),
            in_specs=[
                pl.BlockSpec((1, C, N), lambda b, q: (b, 0, 0)),      # x (resident per batch)
                pl.BlockSpec((2 * C + 8, C), lambda b, q: (0, 0)),    # fused folded weight
                pl.BlockSpec((2 * C + 8, 1), lambda b, q: (0, 0)),    # fused bias
                pl.BlockSpec(memory_space=pltpu.MemorySpace.SMEM),    # gamma scalar
            ],
            out_specs=pl.BlockSpec((1, C, tq), lambda b, q: (b, 0, q)),
            scratch_shapes=[
                pltpu.VMEM((2 * C, N), jnp.bfloat16),   # [A@X ; V] per batch
                pltpu.VMEM((1, N), jnp.float32),        # key-side bias term u
            ],
        ),
        compiler_params=pltpu.CompilerParams(
            dimension_semantics=("parallel", "arbitrary"),
            vmem_limit_bytes=48 * 1024 * 1024,   # headroom on v7x's 64 MiB VMEM
        ),
        input_output_aliases={0: 0},             # out has x's shape/dtype; x[b] is
                                                 # fully VMEM-resident before any
                                                 # tile of batch b is written back
    )(x_bcn, w_full, b_full, gamma_s)

    return out_bcn.reshape(B, C, H, W)


def self_attention_ref(x_nchw, wq, bq, wk, bk, wv, bv, gamma):
    """Pure-JAX reference mirroring the torch SelfAttention.forward exactly."""
    B, C, H, W = x_nchw.shape
    C8 = wq.shape[0]
    N = H * W
    x_flat = x_nchw.reshape(B, C, N)
    q = jnp.einsum('oc,bcn->bon', wq.reshape(C8, C), x_flat) + bq[None, :, None]
    k = jnp.einsum('oc,bcn->bon', wk.reshape(C8, C), x_flat) + bk[None, :, None]
    v = jnp.einsum('oc,bcn->bon', wv.reshape(C, C), x_flat) + bv[None, :, None]
    energy = jnp.einsum('bci,bcj->bij', q, k)
    attn = jax.nn.softmax(energy, axis=-1)
    out = jnp.einsum('bcj,bij->bci', v, attn)
    return gamma[0] * out.reshape(B, C, H, W) + x_nchw


# --------------------------------------------------------------------------- #
# Full discriminator forward (attention block = Pallas kernel)
# --------------------------------------------------------------------------- #
def _conv2d(x, w, b, stride, padding):
    out = lax.conv_general_dilated(
        x, w, window_strides=(stride, stride),
        padding=[(padding, padding), (padding, padding)],
        dimension_numbers=('NCHW', 'OIHW', 'NCHW'))
    return out + b[None, :, None, None]


def _instance_norm(x, eps=1e-5):
    mean = jnp.mean(x, axis=(2, 3), keepdims=True)
    var = jnp.var(x, axis=(2, 3), keepdims=True)
    return (x - mean) * lax.rsqrt(var + eps)


def _leaky_relu(x, slope=0.2):
    return jnp.where(x >= 0, x, slope * x)


def discriminator_forward(params, x, attn_fn):
    # TODO(synk): the 4x4 strided convs / InstanceNorm2d / LeakyReLU stages are
    # run as plain XLA ops; only the SelfAttention block is a Pallas kernel.
    p = params
    x = _leaky_relu(_conv2d(x, p['w1'], p['b1'], 2, 1))
    x = _leaky_relu(_instance_norm(_conv2d(x, p['w2'], p['b2'], 2, 1)))
    x = attn_fn(x, p['wq'], p['bq'], p['wk'], p['bk'], p['wv'], p['bv'], p['gamma'])
    x = _leaky_relu(_instance_norm(_conv2d(x, p['w3'], p['b3'], 2, 1)))
    x = _leaky_relu(_instance_norm(_conv2d(x, p['w4'], p['b4'], 1, 1)))
    x = _conv2d(x, p['w5'], p['b5'], 1, 1)
    return x


def init_discriminator_params(key, input_nc=3, output_nc=1, ndf=64):
    ks = jax.random.split(key, 11)

    def w(k, o, i, kh, kw, std):
        return std * jax.random.normal(k, (o, i, kh, kw), jnp.float32)

    C = ndf * 2          # attention channels: SelfAttention(128) in the module
    C8 = C // 8
    return dict(
        w1=w(ks[0], ndf, input_nc, 4, 4, 0.02),      b1=jnp.zeros((ndf,), jnp.float32),
        w2=w(ks[1], ndf * 2, ndf, 4, 4, 0.02),       b2=jnp.zeros((ndf * 2,), jnp.float32),
        w3=w(ks[2], ndf * 4, ndf * 2, 4, 4, 0.02),   b3=jnp.zeros((ndf * 4,), jnp.float32),
        w4=w(ks[3], ndf * 8, ndf * 4, 4, 4, 0.02),   b4=jnp.zeros((ndf * 8,), jnp.float32),
        w5=w(ks[4], output_nc, ndf * 8, 4, 4, 0.02), b5=jnp.zeros((output_nc,), jnp.float32),
        wq=w(ks[5], C8, C, 1, 1, 0.05), bq=0.05 * jax.random.normal(ks[6], (C8,), jnp.float32),
        wk=w(ks[7], C8, C, 1, 1, 0.05), bk=0.05 * jax.random.normal(ks[8], (C8,), jnp.float32),
        wv=w(ks[9], C, C, 1, 1, 0.05),  bv=0.05 * jax.random.normal(ks[10], (C,), jnp.float32),
        # torch init is gamma = 0 (attention branch disabled at init); use a
        # nonzero deterministic value so the Pallas path is actually exercised.
        gamma=jnp.array([0.5], jnp.float32),
    )


if __name__ == "__main__":
    key = jax.random.PRNGKey(0)

    # ---- 1) standalone SelfAttention kernel check (C=128, N=256, 2 query tiles)
    B, C, H, W = 2, 128, 16, 16
    C8 = C // 8
    ks = jax.random.split(key, 8)
    x = jax.random.normal(ks[0], (B, C, H, W), jnp.float32)
    wq = 0.1 * jax.random.normal(ks[1], (C8, C, 1, 1), jnp.float32)
    bq = 0.1 * jax.random.normal(ks[2], (C8,), jnp.float32)
    wk = 0.1 * jax.random.normal(ks[3], (C8, C, 1, 1), jnp.float32)
    bk = 0.1 * jax.random.normal(ks[4], (C8,), jnp.float32)
    wv = 0.1 * jax.random.normal(ks[5], (C, C, 1, 1), jnp.float32)
    bv = 0.1 * jax.random.normal(ks[6], (C,), jnp.float32)
    gamma = jnp.array([0.5], jnp.float32)

    attn_jit = jax.jit(functools.partial(self_attention_pallas, tq=128))
    out = attn_jit(x, wq, bq, wk, bk, wv, bv, gamma)
    jax.block_until_ready(out)
    ref = self_attention_ref(x, wq, bq, wk, bk, wv, bv, gamma)
    assert out.shape == (B, C, H, W)
    # bf16 MXU operands + (optional) bf16 EUP exp + approx reciprocal vs f32 ref.
    err = jnp.max(jnp.abs(out - ref))
    assert jnp.allclose(out, ref, atol=7e-2, rtol=7e-2), f"attn max err {err}"

    # ---- 2) full discriminator forward with the Pallas attention inside
    input_nc, output_nc = 3, 1
    params = init_discriminator_params(jax.random.PRNGKey(1), input_nc, output_nc, ndf=64)
    img = jax.random.normal(jax.random.PRNGKey(2), (2, input_nc, 64, 64), jnp.float32)

    fwd_pallas = jax.jit(functools.partial(discriminator_forward,
                                           attn_fn=self_attention_pallas))
    fwd_ref = jax.jit(functools.partial(discriminator_forward,
                                        attn_fn=self_attention_ref))
    y = fwd_pallas(params, img)
    jax.block_until_ready(y)
    y_ref = fwd_ref(params, img)
    assert y.shape == (2, output_nc, 6, 6), y.shape
    err2 = jnp.max(jnp.abs(y - y_ref))
    assert jnp.allclose(y, y_ref, atol=5e-2, rtol=5e-2), f"disc max err {err2}"

    print("KERNEL_OK")
</pallas_src>

<mosaic_0001>
module attributes {stable_mosaic.version = 11 : i64} {
  func.func @_self_attn_kernel(%arg0: i32, %arg1: i32, %arg2: memref<1x128x256xf32, #tpu.memory_space<vmem>>, %arg3: memref<264x128xbf16, #tpu.memory_space<vmem>>, %arg4: memref<264x1xf32, #tpu.memory_space<vmem>>, %arg5: memref<1xf32, #tpu.memory_space<smem>>, %arg6: memref<1x128x128xf32, #tpu.memory_space<vmem>>, %arg7: memref<256x256xbf16, #tpu.memory_space<vmem>>, %arg8: memref<1x256xf32, #tpu.memory_space<vmem>>) attributes {dimension_semantics = [#tpu.dimension_semantics<parallel>, #tpu.dimension_semantics<arbitrary>], iteration_bounds = array<i64: 2, 2>, scalar_prefetch = 0 : i64, scratch_operands = 2 : i64, tpu.core_type = #tpu.core_type<tc>, window_params = [{transform_indices = @transform_0, window_bounds = array<i64: 1, 128, 256>}, {pipeline_mode = #tpu.pipeline_mode<synchronous>, transform_indices = @transform_1, window_bounds = array<i64: 264, 128>}, {pipeline_mode = #tpu.pipeline_mode<synchronous>, transform_indices = @transform_2, window_bounds = array<i64: 264, 1>}, {transform_indices = @transform_3, window_bounds = array<i64: 1>}, {transform_indices = @transform_4, window_bounds = array<i64: 1, 128, 128>}]} {
    %c0_i32 = arith.constant 0 : i32
    %0 = arith.cmpi eq, %arg1, %c0_i32 : i32
    %1 = arith.extui %0 : i1 to i32
    %c0_i32_0 = arith.constant 0 : i32
    %2 = arith.cmpi ne, %1, %c0_i32_0 : i32
    scf.if %2 {
      %c0_14 = arith.constant 0 : index
      %c0_15 = arith.constant 0 : index
      %c0_16 = arith.constant 0 : index
      %37 = vector.load %arg2[%c0_14, %c0_15, %c0_16] : memref<1x128x256xf32, #tpu.memory_space<vmem>>, vector<1x128x256xf32>
      %38 = vector.shape_cast %37 : vector<1x128x256xf32> to vector<128x256xf32>
      %39 = arith.truncf %38 : vector<128x256xf32> to vector<128x256xbf16>
      %c0_17 = arith.constant 0 : index
      %c0_18 = arith.constant 0 : index
      %40 = vector.load %arg3[%c0_17, %c0_18] : memref<264x128xbf16, #tpu.memory_space<vmem>>, vector<264x128xbf16>
      %cst_19 = arith.constant dense<0.000000e+00> : vector<264x256xf32>
      %41 = tpu.matmul %40, %39, %cst_19 {dimension_numbers = #tpu.dot_dimension_numbers<[1], [0], [0], [1], [0, 0, 1, 1], [], []>} : vector<264x128xbf16>, vector<128x256xbf16>, vector<264x256xf32> -> vector<264x256xf32>
      %c0_20 = arith.constant 0 : index
      %c0_21 = arith.constant 0 : index
      %42 = vector.load %arg4[%c0_20, %c0_21] : memref<264x1xf32, #tpu.memory_space<vmem>>, vector<264x1xf32>
      %43 = vector.broadcast %42 : vector<264x1xf32> to vector<264x256xf32>
      %44 = arith.addf %41, %43 : vector<264x256xf32>
      %45 = vector.extract_strided_slice %44 {offsets = [0, 0], sizes = [256, 256], strides = [1, 1]} : vector<264x256xf32> to vector<256x256xf32>
      %46 = arith.truncf %45 : vector<256x256xf32> to vector<256x256xbf16>
      %c0_22 = arith.constant 0 : index
      %c0_23 = arith.constant 0 : index
      %47 = vector.load %arg7[%c0_22, %c0_23] : memref<256x256xbf16, #tpu.memory_space<vmem>>, vector<256x256xbf16>
      tpu.vector_store %arg7[%c0_22, %c0_23], %46 {strides = array<i32>} : memref<256x256xbf16, #tpu.memory_space<vmem>>, vector<256x256xbf16>,
      %48 = vector.extract_strided_slice %44 {offsets = [256, 0], sizes = [1, 256], strides = [1, 1]} : vector<264x256xf32> to vector<1x256xf32>
      %c0_24 = arith.constant 0 : index
      %c0_25 = arith.constant 0 : index
      %49 = vector.load %arg8[%c0_24, %c0_25] : memref<1x256xf32, #tpu.memory_space<vmem>>, vector<1x256xf32>
      tpu.vector_store %arg8[%c0_24, %c0_25], %48 {strides = array<i32>} : memref<1x256xf32, #tpu.memory_space<vmem>>, vector<1x256xf32>,
    } else {
    }
    %c128_i32 = arith.constant 128 : i32
    %3 = arith.muli %arg1, %c128_i32 : i32
    %4 = tpu.assume_multiple %3, 128 : i32
    %c0 = arith.constant 0 : index
    %c0_1 = arith.constant 0 : index
    %5 = arith.index_cast %4 : i32 to index
    %6 = vector.load %arg2[%c0, %c0_1, %5] : memref<1x128x256xf32, #tpu.memory_space<vmem>>, vector<1x128x128xf32>
    %7 = vector.shape_cast %6 : vector<1x128x128xf32> to vector<128x128xf32>
    %c0_2 = arith.constant 0 : index
    %c0_3 = arith.constant 0 : index
    %8 = vector.load %arg7[%c0_2, %c0_3] : memref<256x256xbf16, #tpu.memory_space<vmem>>, vector<128x256xbf16>
    %9 = arith.truncf %7 : vector<128x128xf32> to vector<128x128xbf16>
    %cst = arith.constant dense<0.000000e+00> : vector<128x256xf32>
    %10 = tpu.matmul %9, %8, %cst {dimension_numbers = #tpu.dot_dimension_numbers<[0], [0], [1], [1], [0, 1, 1, 1], [], []>} : vector<128x128xbf16>, vector<128x256xbf16>, vector<128x256xf32> -> vector<128x256xf32>
    %c0_4 = arith.constant 0 : index
    %c0_5 = arith.constant 0 : index
    %11 = vector.load %arg8[%c0_4, %c0_5] : memref<1x256xf32, #tpu.memory_space<vmem>>, vector<1x256xf32>
    %12 = vector.broadcast %11 : vector<1x256xf32> to vector<128x256xf32>
    %13 = arith.addf %10, %12 : vector<128x256xf32>
    %cst_6 = arith.constant dense<0xFF800000> : vector<128xf32>
    %14 = vector.multi_reduction <maximumf>, %13, %cst_6 [1] : vector<128x256xf32> to vector<128xf32>
    %15 = vector.shape_cast %14 : vector<128xf32> to vector<128x1xf32>
    %16 = vector.broadcast %15 : vector<128x1xf32> to vector<128x256xf32>
    %17 = arith.subf %13, %16 : vector<128x256xf32>
    %18 = arith.truncf %17 : vector<128x256xf32> to vector<128x256xbf16>
    %19 = math.exp %18 : vector<128x256xbf16>
    %20 = arith.extf %19 : vector<128x256xbf16> to vector<128x256xf32>
    %cst_7 = arith.constant dense<0.000000e+00> : vector<128xf32>
    %21 = vector.multi_reduction <add>, %20, %cst_7 [1] : vector<128x256xf32> to vector<128xf32>
    %22 = vector.shape_cast %21 : vector<128xf32> to vector<128x1xf32>
    %23 = tpu.reciprocal %22 {approx = true} : vector<128x1xf32> -> vector<128x1xf32>
    %24 = arith.extf %19 : vector<128x256xbf16> to vector<128x256xf32>
    %25 = vector.broadcast %23 : vector<128x1xf32> to vector<128x256xf32>
    %26 = arith.mulf %24, %25 : vector<128x256xf32>
    %27 = arith.truncf %26 : vector<128x256xf32> to vector<128x256xbf16>
    %c128 = arith.constant 128 : index
    %c0_8 = arith.constant 0 : index
    %28 = vector.load %arg7[%c128, %c0_8] : memref<256x256xbf16, #tpu.memory_space<vmem>>, vector<128x256xbf16>
    %cst_9 = arith.constant dense<0.000000e+00> : vector<128x128xf32>
    %29 = tpu.matmul %28, %27, %cst_9 {dimension_numbers = #tpu.dot_dimension_numbers<[1], [1], [0], [0], [0, 0, 1, 0], [], []>} : vector<128x256xbf16>, vector<128x256xbf16>, vector<128x128xf32> -> vector<128x128xf32>
    %c0_10 = arith.constant 0 : index
    %30 = memref.load %arg5[%c0_10] : memref<1xf32, #tpu.memory_space<smem>>
    %31 = vector.broadcast %30 : f32 to vector<128x128xf32>
    %32 = arith.mulf %31, %29 : vector<128x128xf32>
    %33 = arith.addf %32, %7 : vector<128x128xf32>
    %c0_11 = arith.constant 0 : index
    %c0_12 = arith.constant 0 : index
    %c0_13 = arith.constant 0 : index
    %34 = vector.load %arg6[%c0_11, %c0_12, %c0_13] : memref<1x128x128xf32, #tpu.memory_space<vmem>>, vector<1x128x128xf32>
    %35 = vector.shape_cast %34 : vector<1x128x128xf32> to vector<128x128xf32>
    %36 = vector.shape_cast %33 : vector<128x128xf32> to vector<1x128x128xf32>
    tpu.vector_store %arg6[%c0_11, %c0_12, %c0_13], %36 {strides = array<i32>} : memref<1x128x128xf32, #tpu.memory_space<vmem>>, vector<1x128x128xf32>,
    return
  }
  func.func @transform_0(%arg0: i32, %arg1: i32) -> (i32, i32, i32) {
    %c0_i32 = arith.constant 0 : i32
    %c0_i32_0 = arith.constant 0 : i32
    %c0_i32_1 = arith.constant 0 : i32
    return %arg0, %c0_i32, %c0_i32_0 : i32, i32, i32
  }
  func.func @transform_1(%arg0: i32, %arg1: i32) -> (i32, i32) {
    %c0_i32 = arith.constant 0 : i32
    %c0_i32_0 = arith.constant 0 : i32
    %c0_i32_1 = arith.constant 0 : i32
    return %c0_i32, %c0_i32_0 : i32, i32
  }
  func.func @transform_2(%arg0: i32, %arg1: i32) -> (i32, i32) {
    %c0_i32 = arith.constant 0 : i32
    %c0_i32_0 = arith.constant 0 : i32
    %c0_i32_1 = arith.constant 0 : i32
    return %c0_i32, %c0_i32_0 : i32, i32
  }
  func.func @transform_3(%arg0: i32, %arg1: i32) -> i32 {
    %c0_i32 = arith.constant 0 : i32
    %c0_i32_0 = arith.constant 0 : i32
    return %c0_i32 : i32
  }
  func.func @transform_4(%arg0: i32, %arg1: i32) -> (i32, i32, i32) {
    %c0_i32 = arith.constant 0 : i32
    %c0_i32_0 = arith.constant 0 : i32
    return %arg0, %c0_i32, %arg1 : i32, i32, i32
  }
}

</mosaic_0001>

<llo_original>
// kernel: self_attention_pallas.1
$region0: #{self_attention_pallas.1}
  #allocation0 [shape = 'u32[]', space=smem, size = 0x4, offset = 0x4, fixed_abs, tag = 'smem constant byte address 0x4 - core index']
  #allocation1 [shape = 'u32[72,128]{1,0:T(1,128)}', space=vmem, size = 0x9000, scoped, tag = 'internal scratch']
  #allocation2 [shape = 'bf16[256,256]{1,0:T(8,128)(2,1)}', space=vmem, size = 0x20000, scoped, tag = 'scratch operand']
  #allocation3 [shape = 'f32[1,256]{1,0:T(1,128)}', space=vmem, size = 0x400, scoped, tag = 'scratch operand']
  #allocation4 [shape = 'f32[1]{0:T(128)S(6)}', space=smem, size = 0x200, scoped, tag = 'scoped memory for self_attention_pallas.1']
  %s0 = inlined_call_operand.vmem [shape: f32[2,128,256], index: 0, kind: input, shape index: {}, may-alias: {0,4}]
  %s1 = inlined_call_operand.vmem [shape: bf16[264,128], index: 1, kind: input, shape index: {}]
  %s2 = inlined_call_operand.vmem [shape: f32[264,1], index: 2, kind: input, shape index: {}]
  %s3 = inlined_call_operand.<no memory space> [shape: f32[1], index: 3, kind: input, shape index: {}]
  %s4 = inlined_call_operand.vmem [shape: f32[2,128,256], index: 4, kind: output, shape index: {}, may-alias: {0,4}]
  %s5 = sld [smem:[#allocation0]]
  $region87: #{self_attention_pallas.1} parent=0
    _
  %s7 = ssub.s32 1, %s5
  %s8 = scalar_select 0, %s7, %s5
  %9 = sst [smem:[#allocation4]] %s3
  $region1: #{self_attention_pallas.1} parent=0
    #allocation5 [shape = 'u8[131072]{0}', space=vmem, size = 0x20000, scoped, tag = 'output window, operand 0']
    loop: start=0, step=1, limit=6
    $region2: #{self_attention_pallas.1} parent=1 // loop_pre_header
      _
    $region3: #{self_attention_pallas.1} parent=1 // loop_header
      %s11 = sphi 0, %s15
      %p12 = scmp.ge.s32.totalorder %s11, 6
      %s18 = sphi 0, %s30
      %s19 = sphi 0, %s26
      %s20 = sphi 0, %s18
      %s21 = sphi 0, %s19
      %s22 = sphi 0, %s20
      %s23 = sphi 0, %s21
      %s33 = sphi 0, %s35
      %s36 = sphi 0, %s33
      %s37 = sphi 0, %s36
      %s53 = sphi 0, %s37
      %s57 = sphi 0, %s57
      %s59 = sphi 0, %s57
      %s60 = sphi 0, %s59
      %s74 = sphi 0, %s60
      %s78 = sphi 0, %s78
      %s80 = sphi 0, %s78
      %s81 = sphi 0, %s80
      %s95 = sphi 0, %s81
      %s99 = sphi 0, %s99
      %s101 = sphi 0, %s99
      %s102 = sphi 0, %s101
      %s116 = sphi 0, %s102
      %s124 = sphi 0, %s126
      %s127 = sphi 0, %s124
      %s128 = sphi 0, %s127
      %s144 = sphi 0, %s128
    $region4: #{self_attention_pallas.1} parent=1 // loop_header_branch
      %14 = sbr.rel (%p12) target = $region8
    $region5: #{self_attention_pallas.1} parent=1 // loop_body
      %s16 = ssub.s32 %s11, 1
      %s17 = ssub.s32 %s11, 2
      %s24 = sadd.s32 1, %s19
      %p25 = scmp.ge.s32.totalorder %s24, 2
      %s26 = scalar_select %p25, 0, %s24
      %s27 = sadd.s32 1, %s18
      %s28 = scalar_select %p25, %s27, %s18
      %p29 = scmp.ge.s32.totalorder %s28, 2
      %s30 = scalar_select %p29, 0, %s28
      %s31 = ssub.s32 %s18, %s30
      %p32 = scmp.eq.s32.totalorder %s31, 0
      %s34 = sadd.s32 %s33, 1
      %s35 = scalar_select %p32, %s33, %s34
      %p38 = pneg %p32
      %p39 = scmp.eq.s32.totalorder %s11, 3
      %p40 = por %p38, %p39
      %p41 = scmp.ne.s32.totalorder %s33, %s36
      %p42 = scmp.eq.s32.totalorder %s11, 0
      %p43 = por %p41, %p42
      %p44 = scmp.ne.s32.totalorder %s33, %s36
      %p45 = scmp.eq.s32.totalorder %s16, 3
      %p46 = por %p44, %p45
      %p47 = scmp.ne.s32.totalorder %s36, %s37
      %p48 = scmp.eq.s32.totalorder %s16, 0
      %p49 = por %p47, %p48
      %p50 = scmp.ne.s32.totalorder %s36, %s37
      %p51 = scmp.eq.s32.totalorder %s17, 3
      %p52 = por %p50, %p51
      %p54 = scmp.ne.s32.totalorder %s37, %s53
      %p55 = scmp.eq.s32.totalorder %s17, 0
      %p56 = por %p54, %p55
      %s58 = sadd.s32 %s57, 1
      %p61 = scmp.eq.s32.totalorder %s11, 3
      %p62 = scmp.ne.s32.totalorder %s57, %s59
      %p63 = scmp.eq.s32.totalorder %s11, 0
      %p64 = por %p62, %p63
      %p65 = scmp.ne.s32.totalorder %s57, %s59
      %p66 = scmp.eq.s32.totalorder %s16, 3
      %p67 = por %p65, %p66
      %p68 = scmp.ne.s32.totalorder %s59, %s60
      %p69 = scmp.eq.s32.totalorder %s16, 0
      %p70 = por %p68, %p69
      %p71 = scmp.ne.s32.totalorder %s59, %s60
      %p72 = scmp.eq.s32.totalorder %s17, 3
      %p73 = por %p71, %p72
      %p75 = scmp.ne.s32.totalorder %s60, %s74
      %p76 = scmp.eq.s32.totalorder %s17, 0
      %p77 = por %p75, %p76
      %s79 = sadd.s32 %s78, 1
      %p82 = scmp.eq.s32.totalorder %s11, 3
      %p83 = scmp.ne.s32.totalorder %s78, %s80
      %p84 = scmp.eq.s32.totalorder %s11, 0
      %p85 = por %p83, %p84
      %p86 = scmp.ne.s32.totalorder %s78, %s80
      %p87 = scmp.eq.s32.totalorder %s16, 3
      %p88 = por %p86, %p87
      %p89 = scmp.ne.s32.totalorder %s80, %s81
      %p90 = scmp.eq.s32.totalorder %s16, 0
      %p91 = por %p89, %p90
      %p92 = scmp.ne.s32.totalorder %s80, %s81
      %p93 = scmp.eq.s32.totalorder %s17, 3
      %p94 = por %p92, %p93
      %p96 = scmp.ne.s32.totalorder %s81, %s95
      %p97 = scmp.eq.s32.totalorder %s17, 0
      %p98 = por %p96, %p97
      %s100 = sadd.s32 %s99, 1
      %p103 = scmp.eq.s32.totalorder %s11, 3
      %p104 = scmp.ne.s32.totalorder %s99, %s101
      %p105 = scmp.eq.s32.totalorder %s11, 0
      %p106 = por %p104, %p105
      %p107 = scmp.ne.s32.totalorder %s99, %s101
      %p108 = scmp.eq.s32.totalorder %s16, 3
      %p109 = por %p107, %p108
      %p110 = scmp.ne.s32.totalorder %s101, %s102
      %p111 = scmp.eq.s32.totalorder %s16, 0
      %p112 = por %p110, %p111
      %p113 = scmp.ne.s32.totalorder %s101, %s102
      %p114 = scmp.eq.s32.totalorder %s17, 3
      %p115 = por %p113, %p114
      %p117 = scmp.ne.s32.totalorder %s102, %s116
      %p118 = scmp.eq.s32.totalorder %s17, 0
      %p119 = por %p117, %p118
      %s120 = ssub.s32 %s18, %s30
      %s121 = ssub.s32 %s19, %s26
      %s122 = sor.u32 %s120, %s121
      %p123 = scmp.eq.s32.totalorder %s122, 0
      %s125 = sadd.s32 %s124, 1
      %s126 = scalar_select %p123, %s124, %s125
      %p129 = pneg %p123
      %p130 = scmp.eq.s32.totalorder %s11, 3
      %p131 = por %p129, %p130
      %p132 = scmp.ne.s32.totalorder %s124, %s127
      %p133 = scmp.eq.s32.totalorder %s11, 0
      %p134 = por %p132, %p133
      %p135 = scmp.ne.s32.totalorder %s124, %s127
      %p136 = scmp.eq.s32.totalorder %s16, 3
      %p137 = por %p135, %p136
      %p138 = scmp.ne.s32.totalorder %s127, %s128
      %p139 = scmp.eq.s32.totalorder %s16, 0
      %p140 = por %p138, %p139
      %p141 = scmp.ne.s32.totalorder %s127, %s128
      %p142 = scmp.eq.s32.totalorder %s17, 3
      %p143 = por %p141, %p142
      %p145 = scmp.ne.s32.totalorder %s128, %s144
      %p146 = scmp.eq.s32.totalorder %s17, 0
      %p147 = por %p145, %p146
      %p148 = scmp.le.s32.totalorder 1, %s11
      %p149 = scmp.lt.s32.totalorder %s11, 5
      %p150 = pnand %p148, %p149
      %p151 = pneg %p150
      // Predicated region
      $region9: #{self_attention_pallas.1} parent=5 // pred_check
        _
      $region10: #{self_attention_pallas.1} parent=5 // pred_check_branch
        %153 = sbr.rel (%p150) target = $region12
      $region11: #{self_attention_pallas.1} parent=5 // pred_region
        %s154 = ssub.s32 %s11, 1
        // Predicated region
        $region13: #{self_attention_pallas.1} parent=11 // pred_check
          %p155 = pneg %p70
        $region14: #{self_attention_pallas.1} parent=11 // pred_check_branch
          %157 = sbr.rel (%p155) target = $region16
        $region15: #{self_attention_pallas.1} parent=11 // pred_region
          _
        $region16: #{self_attention_pallas.1} parent=11 // pred_fallthru
          _
        // Predicated region
        $region17: #{self_attention_pallas.1} parent=11 // pred_check
          %p158 = pneg %p91
        $region18: #{self_attention_pallas.1} parent=11 // pred_check_branch
          %160 = sbr.rel (%p158) target = $region20
        $region19: #{self_attention_pallas.1} parent=11 // pred_region
          _
        $region20: #{self_attention_pallas.1} parent=11 // pred_fallthru
          _
        // Predicated region
        $region21: #{self_attention_pallas.1} parent=11 // pred_check
          %p161 = pneg %p112
        $region22: #{self_attention_pallas.1} parent=11 // pred_check_branch
          %163 = sbr.rel (%p161) target = $region24
        $region23: #{self_attention_pallas.1} parent=11 // pred_region
          _
        $region24: #{self_attention_pallas.1} parent=11 // pred_fallthru
          _
      $region12: #{self_attention_pallas.1} parent=5 // pred_fallthru
        _
      %p164 = scmp.lt.s32.totalorder %s11, 4
      // Predicated region
      $region25: #{self_attention_pallas.1} parent=5 // pred_check
        %p165 = pneg %p164
      $region26: #{self_attention_pallas.1} parent=5 // pred_check_branch
        %167 = sbr.rel (%p165) target = $region28
      $region27: #{self_attention_pallas.1} parent=5 // pred_region
        // Predicated region
        $region29: #{self_attention_pallas.1} parent=27 // pred_check
          %p168 = pneg %p43
        $region30: #{self_attention_pallas.1} parent=27 // pred_check_branch
          %170 = sbr.rel (%p168) target = $region32
        $region31: #{self_attention_pallas.1} parent=27 // pred_region
          %p171 = scmp.lt.s32.totalorder %s18, 1
          %s172 = scalar_select %p171, %s18, 1
          %s173 = smul.addr %s172, 32
          %s174 = smul.addr %s173, 8
          %s175 = scalar_lea.vmem %s0, %s174
        $region32: #{self_attention_pallas.1} parent=27 // pred_fallthru
          _
      $region28: #{self_attention_pallas.1} parent=5 // pred_fallthru
        _
      %p176 = scmp.le.s32.totalorder 1, %s11
      %p177 = scmp.lt.s32.totalorder %s11, 5
      %p178 = pnand %p176, %p177
      %p179 = pneg %p178
      // Predicated region
      $region33: #{self_attention_pallas.1} parent=5 // pred_check
        _
      $region34: #{self_attention_pallas.1} parent=5 // pred_check_branch
        %181 = sbr.rel (%p178) target = $region36
      $region35: #{self_attention_pallas.1} parent=5 // pred_region
        %s182 = ssub.s32 %s11, 1
        %p183 = scmp.lt.s32.totalorder %s20, 1
        %s184 = scalar_select %p183, %s20, 1
        %s185 = smul.addr %s184, 32
        %s186 = smul.addr %s185, 8
        %s187 = scalar_lea.vmem %s0, %s186
        %p188 = pneg %p49
        %p189 = pneg %p46
        %p190 = pneg %p70
        %p191 = pneg %p67
        %p192 = pneg %p91
        %p193 = pneg %p88
        %p194 = pneg %p112
        %p195 = pneg %p109
        %p196 = pneg %p140
        %p197 = pneg %p137
        %s198 = sand.u32 %s127, 1
        %s199 = sand.u32 %s127, 1
        %s200 = smul.addr %s199, 128
        %s201 = scalar_lea.vmem [#allocation5], %s200
        %p202 = scmp.lt.s32.totalorder %s20, 1
        %s203 = scalar_select %p202, %s20, 1
        %s204 = smul.addr %s203, 32
        %s205 = smul.addr %s204, 8
        %s206 = scalar_lea.vmem %s0, %s205
        %p207 = scmp.eq.s32.totalorder %s21, 0
        // Predicated region
        $region37: #{self_attention_pallas.1} parent=35 // pred_check
          %p208 = pneg %p207
        $region38: #{self_attention_pallas.1} parent=35 // pred_check_branch
          %210 = sbr.rel (%p208) target = $region40
        $region39: #{self_attention_pallas.1} parent=35 // pred_region
          %v211 = vld [vmem:[%s206] sm:$0xff]
          %v212 = vld [vmem:[%s206 + $0x8] sm:$0xff]
          %v213 = vld [vmem:[%s206 + $0x10] sm:$0xff]
          %v214 = vld [vmem:[%s206 + $0x18] sm:$0xff]
          %v215 = vld [vmem:[%s206 + $0x20] sm:$0xff]
          %v216 = vld [vmem:[%s206 + $0x28] sm:$0xff]
          %v217 = vld [vmem:[%s206 + $0x30] sm:$0xff]
          %v218 = vld [vmem:[%s206 + $0x38] sm:$0xff]
          %v219 = vld [vmem:[%s206 + $0x40] sm:$0xff]
          %v220 = vld [vmem:[%s206 + $0x48] sm:$0xff]
          %v221 = vld [vmem:[%s206 + $0x50] sm:$0xff]
          %v222 = vld [vmem:[%s206 + $0x58] sm:$0xff]
          %v223 = vld [vmem:[%s206 + $0x60] sm:$0xff]
          %v224 = vld [vmem:[%s206 + $0x68] sm:$0xff]
          %v225 = vld [vmem:[%s206 + $0x70] sm:$0xff]
          %v226 = vld [vmem:[%s206 + $0x78] sm:$0xff]
          %v227 = vld [vmem:[%s206 + $0x80] sm:$0xff]
          %v228 = vld [vmem:[%s206 + $0x88] sm:$0xff]
          %v229 = vld [vmem:[%s206 + $0x90] sm:$0xff]
          %v230 = vld [vmem:[%s206 + $0x98] sm:$0xff]
          %v231 = vld [vmem:[%s206 + $0xa0] sm:$0xff]
          %v232 = vld [vmem:[%s206 + $0xa8] sm:$0xff]
          %v233 = vld [vmem:[%s206 + $0xb0] sm:$0xff]
          %v234 = vld [vmem:[%s206 + $0xb8] sm:$0xff]
          %v235 = vld [vmem:[%s206 + $0xc0] sm:$0xff]
          %v236 = vld [vmem:[%s206 + $0xc8] sm:$0xff]
          %v237 = vld [vmem:[%s206 + $0xd0] sm:$0xff]
          %v238 = vld [vmem:[%s206 + $0xd8] sm:$0xff]
          %v239 = vld [vmem:[%s206 + $0xe0] sm:$0xff]
          %v240 = vld [vmem:[%s206 + $0xe8] sm:$0xff]
          %v241 = vld [vmem:[%s206 + $0xf0] sm:$0xff]
          %v242 = vld [vmem:[%s206 + $0xf8] sm:$0xff]
          %v243 = vpack.c.bf16 %v213, %v211
          %v244 = vpack.c.bf16 %v214, %v212
          %v245 = vpack.c.bf16 %v217, %v215
          %v246 = vpack.c.bf16 %v218, %v216
          %v247 = vpack.c.bf16 %v221, %v219
          %v248 = vpack.c.bf16 %v222, %v220
          %v249 = vpack.c.bf16 %v225, %v223
          %v250 = vpack.c.bf16 %v226, %v224
          %v251 = vpack.c.bf16 %v229, %v227
          %v252 = vpack.c.bf16 %v230, %v228
          %v253 = vpack.c.bf16 %v233, %v231
          %v254 = vpack.c.bf16 %v234, %v232
          %v255 = vpack.c.bf16 %v237, %v235
          %v256 = vpack.c.bf16 %v238, %v236
          %v257 = vpack.c.bf16 %v241, %v239
          %v258 = vpack.c.bf16 %v242, %v240
          %v259 = vld [vmem:[%s1] sm:$0xf]
          %v260 = vld [vmem:[%s1 + $0x4] sm:$0xf]
          %v261 = vld [vmem:[%s1 + $0x8] sm:$0xf]
          %v262 = vld [vmem:[%s1 + $0xc] sm:$0xf]
          %v263 = vld [vmem:[%s1 + $0x10] sm:$0xf]
          %v264 = vld [vmem:[%s1 + $0x14] sm:$0xf]
          %v265 = vld [vmem:[%s1 + $0x18] sm:$0xf]
          %v266 = vld [vmem:[%s1 + $0x1c] sm:$0xf]
          %v267 = vld [vmem:[%s1 + $0x20] sm:$0xf]
          %v268 = vld [vmem:[%s1 + $0x24] sm:$0xf]
          %v269 = vld [vmem:[%s1 + $0x28] sm:$0xf]
          %v270 = vld [vmem:[%s1 + $0x2c] sm:$0xf]
          %v271 = vld [vmem:[%s1 + $0x30] sm:$0xf]
          %v272 = vld [vmem:[%s1 + $0x34] sm:$0xf]
          %v273 = vld [vmem:[%s1 + $0x38] sm:$0xf]
          %v274 = vld [vmem:[%s1 + $0x3c] sm:$0xf]
          %v275 = vld [vmem:[%s1 + $0x40] sm:$0xf]
          %v276 = vld [vmem:[%s1 + $0x44] sm:$0xf]
          %v277 = vld [vmem:[%s1 + $0x48] sm:$0xf]
          %v278 = vld [vmem:[%s1 + $0x4c] sm:$0xf]
          %v279 = vld [vmem:[%s1 + $0x50] sm:$0xf]
          %v280 = vld [vmem:[%s1 + $0x54] sm:$0xf]
          %v281 = vld [vmem:[%s1 + $0x58] sm:$0xf]
          %v282 = vld [vmem:[%s1 + $0x5c] sm:$0xf]
          %v283 = vld [vmem:[%s1 + $0x60] sm:$0xf]
          %v284 = vld [vmem:[%s1 + $0x64] sm:$0xf]
          %v285 = vld [vmem:[%s1 + $0x68] sm:$0xf]
          %v286 = vld [vmem:[%s1 + $0x6c] sm:$0xf]
          %v287 = vld [vmem:[%s1 + $0x70] sm:$0xf]
          %v288 = vld [vmem:[%s1 + $0x74] sm:$0xf]
          %v289 = vld [vmem:[%s1 + $0x78] sm:$0xf]
          %v290 = vld [vmem:[%s1 + $0x7c] sm:$0xf]
          %v291 = vld [vmem:[%s1 + $0x80] sm:$0xf]
          %v292 = vld [vmem:[%s2] sm:$0xff]
          %v293 = vld [vmem:[%s2 + $0x8] sm:$0xff]
          %v294 = vld [vmem:[%s2 + $0x10] sm:$0xff]
          %v295 = vld [vmem:[%s2 + $0x18] sm:$0xff]
          %v296 = vld [vmem:[%s2 + $0x20] sm:$0xff]
          %v297 = vld [vmem:[%s2 + $0x28] sm:$0xff]
          %v298 = vld [vmem:[%s2 + $0x30] sm:$0xff]
          %v299 = vld [vmem:[%s2 + $0x38] sm:$0xff]
          %v300 = vld [vmem:[%s2 + $0x40] sm:$0xff]
          %v301 = vld [vmem:[%s2 + $0x48] sm:$0xff]
          %v302 = vld [vmem:[%s2 + $0x50] sm:$0xff]
          %v303 = vld [vmem:[%s2 + $0x58] sm:$0xff]
          %v304 = vld [vmem:[%s2 + $0x60] sm:$0xff]
          %v305 = vld [vmem:[%s2 + $0x68] sm:$0xff]
          %v306 = vld [vmem:[%s2 + $0x70] sm:$0xff]
          %v307 = vld [vmem:[%s2 + $0x78] sm:$0xff]
          %v308 = vld [vmem:[%s2 + $0x80] sm:$0xff]
          %v309 = vld [vmem:[%s2 + $0x88] sm:$0xff]
          %v310 = vld [vmem:[%s2 + $0x90] sm:$0xff]
          %v311 = vld [vmem:[%s2 + $0x98] sm:$0xff]
          %v312 = vld [vmem:[%s2 + $0xa0] sm:$0xff]
          %v313 = vld [vmem:[%s2 + $0xa8] sm:$0xff]
          %v314 = vld [vmem:[%s2 + $0xb0] sm:$0xff]
          %v315 = vld [vmem:[%s2 + $0xb8] sm:$0xff]
          %v316 = vld [vmem:[%s2 + $0xc0] sm:$0xff]
          %v317 = vld [vmem:[%s2 + $0xc8] sm:$0xff]
          %v318 = vld [vmem:[%s2 + $0xd0] sm:$0xff]
          %v319 = vld [vmem:[%s2 + $0xd8] sm:$0xff]
          %v320 = vld [vmem:[%s2 + $0xe0] sm:$0xff]
          %v321 = vld [vmem:[%s2 + $0xe8] sm:$0xff]
          %v322 = vld [vmem:[%s2 + $0xf0] sm:$0xff]
          %v323 = vld [vmem:[%s2 + $0xf8] sm:$0xff]
          %v324 = vld [vmem:[%s2 + $0x100] sm:$0xff]
          %326 = vset.pattern.permute.xlu0 0
          %327 = vperm.xlu0 %326, %v292
          %v328 = vpop.permute.xlu0 %327
          %331 = vset.pattern.permute.xlu0 0
          %332 = vperm.xlu0 %331, %v293
          %v333 = vpop.permute.xlu0 %332
          %336 = vset.pattern.permute.xlu0 0
          %337 = vperm.xlu0 %336, %v294
          %v338 = vpop.permute.xlu0 %337
          %341 = vset.pattern.permute.xlu0 0
          %342 = vperm.xlu0 %341, %v295
          %v343 = vpop.permute.xlu0 %342
          %346 = vset.pattern.permute.xlu0 0
          %347 = vperm.xlu0 %346, %v296
          %v348 = vpop.permute.xlu0 %347
          %351 = vset.pattern.permute.xlu0 0
          %352 = vperm.xlu0 %351, %v297
          %v353 = vpop.permute.xlu0 %352
          %356 = vset.pattern.permute.xlu0 0
          %357 = vperm.xlu0 %356, %v298
          %v358 = vpop.permute.xlu0 %357
          %361 = vset.pattern.permute.xlu0 0
          %362 = vperm.xlu0 %361, %v299
          %v363 = vpop.permute.xlu0 %362
          %366 = vset.pattern.permute.xlu0 0
          %367 = vperm.xlu0 %366, %v300
          %v368 = vpop.permute.xlu0 %367
          %371 = vset.pattern.permute.xlu0 0
          %372 = vperm.xlu0 %371, %v301
          %v373 = vpop.permute.xlu0 %372
          %376 = vset.pattern.permute.xlu0 0
          %377 = vperm.xlu0 %376, %v302
          %v378 = vpop.permute.xlu0 %377
          %381 = vset.pattern.permute.xlu0 0
          %382 = vperm.xlu0 %381, %v303
          %v383 = vpop.permute.xlu0 %382
          %386 = vset.pattern.permute.xlu0 0
          %387 = vperm.xlu0 %386, %v304
          %v388 = vpop.permute.xlu0 %387
          %391 = vset.pattern.permute.xlu0 0
          %392 = vperm.xlu0 %391, %v305
          %v393 = vpop.permute.xlu0 %392
          %396 = vset.pattern.permute.xlu0 0
          %397 = vperm.xlu0 %396, %v306
          %v398 = vpop.permute.xlu0 %397
          %401 = vset.pattern.permute.xlu0 0
          %402 = vperm.xlu0 %401, %v307
          %v403 = vpop.permute.xlu0 %402
          %406 = vset.pattern.permute.xlu0 0
          %407 = vperm.xlu0 %406, %v308
          %v408 = vpop.permute.xlu0 %407
          %411 = vset.pattern.permute.xlu0 0
          %412 = vperm.xlu0 %411, %v309
          %v413 = vpop.permute.xlu0 %412
          %416 = vset.pattern.permute.xlu0 0
          %417 = vperm.xlu0 %416, %v310
          %v418 = vpop.permute.xlu0 %417
          %421 = vset.pattern.permute.xlu0 0
          %422 = vperm.xlu0 %421, %v311
          %v423 = vpop.permute.xlu0 %422
          %426 = vset.pattern.permute.xlu0 0
          %427 = vperm.xlu0 %426, %v312
          %v428 = vpop.permute.xlu0 %427
          %431 = vset.pattern.permute.xlu0 0
          %432 = vperm.xlu0 %431, %v313
          %v433 = vpop.permute.xlu0 %432
          %436 = vset.pattern.permute.xlu0 0
          %437 = vperm.xlu0 %436, %v314
          %v438 = vpop.permute.xlu0 %437
          %441 = vset.pattern.permute.xlu0 0
          %442 = vperm.xlu0 %441, %v315
          %v443 = vpop.permute.xlu0 %442
          %446 = vset.pattern.permute.xlu0 0
          %447 = vperm.xlu0 %446, %v316
          %v448 = vpop.permute.xlu0 %447
          %451 = vset.pattern.permute.xlu0 0
          %452 = vperm.xlu0 %451, %v317
          %v453 = vpop.permute.xlu0 %452
          %456 = vset.pattern.permute.xlu0 0
          %457 = vperm.xlu0 %456, %v318
          %v458 = vpop.permute.xlu0 %457
          %461 = vset.pattern.permute.xlu0 0
          %462 = vperm.xlu0 %461, %v319
          %v463 = vpop.permute.xlu0 %462
          %466 = vset.pattern.permute.xlu0 0
          %467 = vperm.xlu0 %466, %v320
          %v468 = vpop.permute.xlu0 %467
          %471 = vset.pattern.permute.xlu0 0
          %472 = vperm.xlu0 %471, %v321
          %v473 = vpop.permute.xlu0 %472
          %476 = vset.pattern.permute.xlu0 0
          %477 = vperm.xlu0 %476, %v322
          %v478 = vpop.permute.xlu0 %477
          %481 = vset.pattern.permute.xlu0 0
          %482 = vperm.xlu0 %481, %v323
          %v483 = vpop.permute.xlu0 %482
          %486 = vset.pattern.permute.xlu0 0
          %487 = vperm.xlu0 %486, %v324
          %v488 = vpop.permute.xlu0 %487
          %v523 = vunpack.c.l.b16 %v259
          %v524 = vunpack.c.l.b16 %v260
          %v525 = vunpack.c.l.b16 %v261
          %v526 = vunpack.c.l.b16 %v262
          %v527 = vunpack.c.l.b16 %v263
          %v528 = vunpack.c.l.b16 %v264
          %v529 = vunpack.c.l.b16 %v265
          %v530 = vunpack.c.l.b16 %v266
          %v531 = vunpack.c.l.b16 %v267
          %v532 = vunpack.c.l.b16 %v268
          %v533 = vunpack.c.l.b16 %v269
          %v534 = vunpack.c.l.b16 %v270
          %v535 = vunpack.c.l.b16 %v271
          %v536 = vunpack.c.l.b16 %v272
          %v537 = vunpack.c.l.b16 %v273
          %v538 = vunpack.c.l.b16 %v274
          %v539 = vunpack.c.l.b16 %v275
          %v540 = vunpack.c.l.b16 %v276
          %v541 = vunpack.c.l.b16 %v277
          %v542 = vunpack.c.l.b16 %v278
          %v543 = vunpack.c.l.b16 %v279
          %v544 = vunpack.c.l.b16 %v280
          %v545 = vunpack.c.l.b16 %v281
          %v546 = vunpack.c.l.b16 %v282
          %v547 = vunpack.c.l.b16 %v283
          %v548 = vunpack.c.l.b16 %v284
          %v549 = vunpack.c.l.b16 %v285
          %v550 = vunpack.c.l.b16 %v286
          %v551 = vunpack.c.l.b16 %v287
          %v552 = vunpack.c.l.b16 %v288
          %v553 = vunpack.c.l.b16 %v289
          %v554 = vunpack.c.l.b16 %v290
          %v555 = vunpack.c.l.b16 %v291
          %v556 = vpack.c.b16 %v524, %v523
          %v557 = vpack.c.b16 %v526, %v525
          %v558 = vpack.c.b16 %v528, %v527
          %v559 = vpack.c.b16 %v530, %v529
          %v560 = vpack.c.b16 %v532, %v531
          %v561 = vpack.c.b16 %v534, %v533
          %v562 = vpack.c.b16 %v536, %v535
          %v563 = vpack.c.b16 %v538, %v537
          %v564 = vpack.c.b16 %v540, %v539
          %v565 = vpack.c.b16 %v542, %v541
          %v566 = vpack.c.b16 %v544, %v543
          %v567 = vpack.c.b16 %v546, %v545
          %v568 = vpack.c.b16 %v548, %v547
          %v569 = vpack.c.b16 %v550, %v549
          %v570 = vpack.c.b16 %v552, %v551
          %v571 = vpack.c.b16 %v554, %v553
          %v572 = vpack.c.b16 %v555, %v555
          %590 = vmatpush.bf16.msra.mxu0 %v257
          %591 = vmatpush.bf16.msra.mxu0 %v255
          %592 = vmatpush.bf16.msra.mxu0 %v253
          %593 = vmatpush.bf16.msra.mxu0 %v251
          %594 = vmatpush.bf16.msra.mxu0 %v249
          %595 = vmatpush.bf16.msra.mxu0 %v247
          %596 = vmatpush.bf16.msra.mxu0 %v245
          %597 = vmatpush.bf16.msra.mxu0 %v243
          %598 = vmatmul.bf16.gmra.mxu0 %v556
          %v599 = vpop.f32.mrf.mxu0
          %v600 = vadd.f32 %v328, %v599
          %v601 = vpop.f32.mrf.mxu0
          %v602 = vadd.f32 %v333, %v601
          %603 = vmatmul.bf16.gmra.mxu0 %v557
          %v604 = vpop.f32.mrf.mxu0
          %v605 = vadd.f32 %v338, %v604
          %v606 = vpop.f32.mrf.mxu0
          %v607 = vadd.f32 %v343, %v606
          %608 = vmatmul.bf16.gmra.mxu0 %v558
          %v609 = vpop.f32.mrf.mxu0
          %v610 = vadd.f32 %v348, %v609
          %v611 = vpop.f32.mrf.mxu0
          %v612 = vadd.f32 %v353, %v611
          %613 = vmatmul.bf16.gmra.mxu0 %v559
          %v614 = vpop.f32.mrf.mxu0
          %v615 = vadd.f32 %v358, %v614
          %v616 = vpop.f32.mrf.mxu0
          %v617 = vadd.f32 %v363, %v616
          %618 = vmatmul.bf16.gmra.mxu0 %v560
          %v619 = vpop.f32.mrf.mxu0
          %v620 = vadd.f32 %v368, %v619
          %v621 = vpop.f32.mrf.mxu0
          %v622 = vadd.f32 %v373, %v621
          %623 = vmatmul.bf16.gmra.mxu0 %v561
          %v624 = vpop.f32.mrf.mxu0
          %v625 = vadd.f32 %v378, %v624
          %v626 = vpop.f32.mrf.mxu0
          %v627 = vadd.f32 %v383, %v626
          %628 = vmatmul.bf16.gmra.mxu0 %v562
          %v629 = vpop.f32.mrf.mxu0
          %v630 = vadd.f32 %v388, %v629
          %v631 = vpop.f32.mrf.mxu0
          %v632 = vadd.f32 %v393, %v631
          %633 = vmatmul.bf16.gmra.mxu0 %v563
          %v634 = vpop.f32.mrf.mxu0
          %v635 = vadd.f32 %v398, %v634
          %v636 = vpop.f32.mrf.mxu0
          %v637 = vadd.f32 %v403, %v636
          %638 = vmatmul.bf16.gmra.mxu0 %v564
          %v639 = vpop.f32.mrf.mxu0
          %v640 = vadd.f32 %v408, %v639
          %v641 = vpop.f32.mrf.mxu0
          %v642 = vadd.f32 %v413, %v641
          %643 = vmatmul.bf16.gmra.mxu0 %v565
          %v644 = vpop.f32.mrf.mxu0
          %v645 = vadd.f32 %v418, %v644
          %v646 = vpop.f32.mrf.mxu0
          %v647 = vadd.f32 %v423, %v646
          %648 = vmatmul.bf16.gmra.mxu0 %v566
          %v649 = vpop.f32.mrf.mxu0
          %v650 = vadd.f32 %v428, %v649
          %v651 = vpop.f32.mrf.mxu0
          %v652 = vadd.f32 %v433, %v651
          %653 = vmatmul.bf16.gmra.mxu0 %v567
          %v654 = vpop.f32.mrf.mxu0
          %v655 = vadd.f32 %v438, %v654
          %v656 = vpop.f32.mrf.mxu0
          %v657 = vadd.f32 %v443, %v656
          %658 = vmatmul.bf16.gmra.mxu0 %v568
          %v659 = vpop.f32.mrf.mxu0
          %v660 = vadd.f32 %v448, %v659
          %v661 = vpop.f32.mrf.mxu0
          %v662 = vadd.f32 %v453, %v661
          %663 = vmatmul.bf16.gmra.mxu0 %v569
          %v664 = vpop.f32.mrf.mxu0
          %v665 = vadd.f32 %v458, %v664
          %v666 = vpop.f32.mrf.mxu0
          %v667 = vadd.f32 %v463, %v666
          %668 = vmatmul.bf16.gmra.mxu0 %v570
          %v669 = vpop.f32.mrf.mxu0
          %v670 = vadd.f32 %v468, %v669
          %v671 = vpop.f32.mrf.mxu0
          %v672 = vadd.f32 %v473, %v671
          %673 = vmatmul.bf16.gmra.mxu0 %v571
          %v674 = vpop.f32.mrf.mxu0
          %v675 = vadd.f32 %v478, %v674
          %v676 = vpop.f32.mrf.mxu0
          %v677 = vadd.f32 %v483, %v676
          %678 = vmatmul.bf16.gmra.mxu0 %v572
          %v679 = vpop.f32.mrf.mxu0
          %v680 = vadd.f32 %v488, %v679
          %v681 = vpop.f32.mrf.mxu0
          %682 = vdwg.mxu0
          %683 = vmatpush.bf16.msra.mxu0 %v258
          %684 = vmatpush.bf16.msra.mxu0 %v256
          %685 = vmatpush.bf16.msra.mxu0 %v254
          %686 = vmatpush.bf16.msra.mxu0 %v252
          %687 = vmatpush.bf16.msra.mxu0 %v250
          %688 = vmatpush.bf16.msra.mxu0 %v248
          %689 = vmatpush.bf16.msra.mxu0 %v246
          %690 = vmatpush.bf16.msra.mxu0 %v244
          %691 = vmatmul.bf16.gmra.mxu0 %v556
          %v692 = vpop.f32.mrf.mxu0
          %v693 = vadd.f32 %v328, %v692
          %v694 = vpop.f32.mrf.mxu0
          %v695 = vadd.f32 %v333, %v694
          %696 = vmatmul.bf16.gmra.mxu0 %v557
          %v697 = vpop.f32.mrf.mxu0
          %v698 = vadd.f32 %v338, %v697
          %v699 = vpop.f32.mrf.mxu0
          %v700 = vadd.f32 %v343, %v699
          %701 = vmatmul.bf16.gmra.mxu0 %v558
          %v702 = vpop.f32.mrf.mxu0
          %v703 = vadd.f32 %v348, %v702
          %v704 = vpop.f32.mrf.mxu0
          %v705 = vadd.f32 %v353, %v704
          %706 = vmatmul.bf16.gmra.mxu0 %v559
          %v707 = vpop.f32.mrf.mxu0
          %v708 = vadd.f32 %v358, %v707
          %v709 = vpop.f32.mrf.mxu0
          %v710 = vadd.f32 %v363, %v709
          %711 = vmatmul.bf16.gmra.mxu0 %v560
          %v712 = vpop.f32.mrf.mxu0
          %v713 = vadd.f32 %v368, %v712
          %v714 = vpop.f32.mrf.mxu0
          %v715 = vadd.f32 %v373, %v714
          %716 = vmatmul.bf16.gmra.mxu0 %v561
          %v717 = vpop.f32.mrf.mxu0
          %v718 = vadd.f32 %v378, %v717
          %v719 = vpop.f32.mrf.mxu0
          %v720 = vadd.f32 %v383, %v719
          %721 = vmatmul.bf16.gmra.mxu0 %v562
          %v722 = vpop.f32.mrf.mxu0
          %v723 = vadd.f32 %v388, %v722
          %v724 = vpop.f32.mrf.mxu0
          %v725 = vadd.f32 %v393, %v724
          %726 = vmatmul.bf16.gmra.mxu0 %v563
          %v727 = vpop.f32.mrf.mxu0
          %v728 = vadd.f32 %v398, %v727
          %v729 = vpop.f32.mrf.mxu0
          %v730 = vadd.f32 %v403, %v729
          %731 = vmatmul.bf16.gmra.mxu0 %v564
          %v732 = vpop.f32.mrf.mxu0
          %v733 = vadd.f32 %v408, %v732
          %v734 = vpop.f32.mrf.mxu0
          %v735 = vadd.f32 %v413, %v734
          %736 = vmatmul.bf16.gmra.mxu0 %v565
          %v737 = vpop.f32.mrf.mxu0
          %v738 = vadd.f32 %v418, %v737
          %v739 = vpop.f32.mrf.mxu0
          %v740 = vadd.f32 %v423, %v739
          %741 = vmatmul.bf16.gmra.mxu0 %v566
          %v742 = vpop.f32.mrf.mxu0
          %v743 = vadd.f32 %v428, %v742
          %v744 = vpop.f32.mrf.mxu0
          %v745 = vadd.f32 %v433, %v744
          %746 = vmatmul.bf16.gmra.mxu0 %v567
          %v747 = vpop.f32.mrf.mxu0
          %v748 = vadd.f32 %v438, %v747
          %v749 = vpop.f32.mrf.mxu0
          %v750 = vadd.f32 %v443, %v749
          %751 = vmatmul.bf16.gmra.mxu0 %v568
          %v752 = vpop.f32.mrf.mxu0
          %v753 = vadd.f32 %v448, %v752
          %v754 = vpop.f32.mrf.mxu0
          %v755 = vadd.f32 %v453, %v754
          %756 = vmatmul.bf16.gmra.mxu0 %v569
          %v757 = vpop.f32.mrf.mxu0
          %v758 = vadd.f32 %v458, %v757
          %v759 = vpop.f32.mrf.mxu0
          %v760 = vadd.f32 %v463, %v759
          %761 = vmatmul.bf16.gmra.mxu0 %v570
          %v762 = vpop.f32.mrf.mxu0
          %v763 = vadd.f32 %v468, %v762
          %v764 = vpop.f32.mrf.mxu0
          %v765 = vadd.f32 %v473, %v764
          %766 = vmatmul.bf16.gmra.mxu0 %v571
          %v767 = vpop.f32.mrf.mxu0
          %v768 = vadd.f32 %v478, %v767
          %v769 = vpop.f32.mrf.mxu0
          %v770 = vadd.f32 %v483, %v769
          %771 = vmatmul.bf16.gmra.mxu0 %v572
          %v772 = vpop.f32.mrf.mxu0
          %v773 = vadd.f32 %v488, %v772
          %v774 = vpop.f32.mrf.mxu0
          %775 = vdwg.mxu0
          %v776 = vpack.c.bf16 %v693, %v600
          %v777 = vpack.c.bf16 %v695, %v602
          %v778 = vpack.c.bf16 %v698, %v605
          %v779 = vpack.c.bf16 %v700, %v607
          %v780 = vpack.c.bf16 %v703, %v610
          %v781 = vpack.c.bf16 %v705, %v612
          %v782 = vpack.c.bf16 %v708, %v615
          %v783 = vpack.c.bf16 %v710, %v617
          %v784 = vpack.c.bf16 %v713, %v620
          %v785 = vpack.c.bf16 %v715, %v622
          %v786 = vpack.c.bf16 %v718, %v625
          %v787 = vpack.c.bf16 %v720, %v627
          %v788 = vpack.c.bf16 %v723, %v630
          %v789 = vpack.c.bf16 %v725, %v632
          %v790 = vpack.c.bf16 %v728, %v635
          %v791 = vpack.c.bf16 %v730, %v637
          %v792 = vpack.c.bf16 %v733, %v640
          %v793 = vpack.c.bf16 %v735, %v642
          %v794 = vpack.c.bf16 %v738, %v645
          %v795 = vpack.c.bf16 %v740, %v647
          %v796 = vpack.c.bf16 %v743, %v650
          %v797 = vpack.c.bf16 %v745, %v652
          %v798 = vpack.c.bf16 %v748, %v655
          %v799 = vpack.c.bf16 %v750, %v657
          %v800 = vpack.c.bf16 %v753, %v660
          %v801 = vpack.c.bf16 %v755, %v662
          %v802 = vpack.c.bf16 %v758, %v665
          %v803 = vpack.c.bf16 %v760, %v667
          %v804 = vpack.c.bf16 %v763, %v670
          %v805 = vpack.c.bf16 %v765, %v672
          %v806 = vpack.c.bf16 %v768, %v675
          %v807 = vpack.c.bf16 %v770, %v677
          %808 = vst [vmem:[#allocation2] sm:$0xff] %v776
          %809 = vst [vmem:[#allocation2 + $0x8] sm:$0xff] %v777
          %810 = vst [vmem:[#allocation2 + $0x10] sm:$0xff] %v778
          %811 = vst [vmem:[#allocation2 + $0x18] sm:$0xff] %v779
          %812 = vst [vmem:[#allocation2 + $0x20] sm:$0xff] %v780
          %813 = vst [vmem:[#allocation2 + $0x28] sm:$0xff] %v781
          %814 = vst [vmem:[#allocation2 + $0x30] sm:$0xff] %v782
          %815 = vst [vmem:[#allocation2 + $0x38] sm:$0xff] %v783
          %816 = vst [vmem:[#allocation2 + $0x40] sm:$0xff] %v784
          %817 = vst [vmem:[#allocation2 + $0x48] sm:$0xff] %v785
          %818 = vst [vmem:[#allocation2 + $0x50] sm:$0xff] %v786
          %819 = vst [vmem:[#allocation2 + $0x58] sm:$0xff] %v787
          %820 = vst [vmem:[#allocation2 + $0x60] sm:$0xff] %v788
          %821 = vst [vmem:[#allocation2 + $0x68] sm:$0xff] %v789
          %822 = vst [vmem:[#allocation2 + $0x70] sm:$0xff] %v790
          %823 = vst [vmem:[#allocation2 + $0x78] sm:$0xff] %v791
          %824 = vst [vmem:[#allocation2 + $0x80] sm:$0xff] %v792
          %825 = vst [vmem:[#allocation2 + $0x88] sm:$0xff] %v793
          %826 = vst [vmem:[#allocation2 + $0x90] sm:$0xff] %v794
          %827 = vst [vmem:[#allocation2 + $0x98] sm:$0xff] %v795
          %828 = vst [vmem:[#allocation2 + $0xa0] sm:$0xff] %v796
          %829 = vst [vmem:[#allocation2 + $0xa8] sm:$0xff] %v797
          %830 = vst [vmem:[#allocation2 + $0xb0] sm:$0xff] %v798
          %831 = vst [vmem:[#allocation2 + $0xb8] sm:$0xff] %v799
          %832 = vst [vmem:[#allocation2 + $0xc0] sm:$0xff] %v800
          %833 = vst [vmem:[#allocation2 + $0xc8] sm:$0xff] %v801
          %834 = vst [vmem:[#allocation2 + $0xd0] sm:$0xff] %v802
          %835 = vst [vmem:[#allocation2 + $0xd8] sm:$0xff] %v803
          %836 = vst [vmem:[#allocation2 + $0xe0] sm:$0xff] %v804
          %837 = vst [vmem:[#allocation2 + $0xe8] sm:$0xff] %v805
          %838 = vst [vmem:[#allocation2 + $0xf0] sm:$0xff] %v806
          %839 = vst [vmem:[#allocation2 + $0xf8] sm:$0xff] %v807
          %v842 = vrot.slane %v773, 7
          %vm843 = vcmask 1040384
          %v844 = vsel %vm843, %v680, %v842
          %v846 = vlaneseq
          %vm847 = vcmp.ge.s32.totalorder %v846, 0
          %vm848 = vcmp.lt.s32.totalorder %v846, 256
          %vm849 = vmand %vm847, %vm848
          %850 = vst.msk [vmem:[#allocation3] sm:$0x3] %vm849, %v844
        $region40: #{self_attention_pallas.1} parent=35 // pred_fallthru
          _
        %s851 = smul.u32 %s21, 128
        %s852 = sshra.s32 %s851, 7
        %s853 = sand.u32 %s851, 127
        %s854 = smul.addr %s852, 8
        %s855 = scalar_lea.vmem %s206, %s854
        %v856 = vld [vmem:[%s855] sm:$0xff]
        %v857 = vld [vmem:[%s855 + $0x10] sm:$0xff]
        %v858 = vld [vmem:[%s855 + $0x20] sm:$0xff]
        %v859 = vld [vmem:[%s855 + $0x30] sm:$0xff]
        %v860 = vld [vmem:[%s855 + $0x40] sm:$0xff]
        %v861 = vld [vmem:[%s855 + $0x50] sm:$0xff]
        %v862 = vld [vmem:[%s855 + $0x60] sm:$0xff]
        %v863 = vld [vmem:[%s855 + $0x70] sm:$0xff]
        %v864 = vld [vmem:[%s855 + $0x80] sm:$0xff]
        %v865 = vld [vmem:[%s855 + $0x90] sm:$0xff]
        %v866 = vld [vmem:[%s855 + $0xa0] sm:$0xff]
        %v867 = vld [vmem:[%s855 + $0xb0] sm:$0xff]
        %v868 = vld [vmem:[%s855 + $0xc0] sm:$0xff]
        %v869 = vld [vmem:[%s855 + $0xd0] sm:$0xff]
        %v870 = vld [vmem:[%s855 + $0xe0] sm:$0xff]
        %v871 = vld [vmem:[%s855 + $0xf0] sm:$0xff]
        %v872 = vld [vmem:[#allocation2] sm:$0xff]
        %v873 = vld [vmem:[#allocation2 + $0x8] sm:$0xff]
        %v874 = vld [vmem:[#allocation2 + $0x10] sm:$0xff]
        %v875 = vld [vmem:[#allocation2 + $0x18] sm:$0xff]
        %v876 = vld [vmem:[#allocation2 + $0x20] sm:$0xff]
        %v877 = vld [vmem:[#allocation2 + $0x28] sm:$0xff]
        %v878 = vld [vmem:[#allocation2 + $0x30] sm:$0xff]
        %v879 = vld [vmem:[#allocation2 + $0x38] sm:$0xff]
        %v880 = vld [vmem:[#allocation2 + $0x40] sm:$0xff]
        %v881 = vld [vmem:[#allocation2 + $0x48] sm:$0xff]
        %v882 = vld [vmem:[#allocation2 + $0x50] sm:$0xff]
        %v883 = vld [vmem:[#allocation2 + $0x58] sm:$0xff]
        %v884 = vld [vmem:[#allocation2 + $0x60] sm:$0xff]
        %v885 = vld [vmem:[#allocation2 + $0x68] sm:$0xff]
        %v886 = vld [vmem:[#allocation2 + $0x70] sm:$0xff]
        %v887 = vld [vmem:[#allocation2 + $0x78] sm:$0xff]
        %v888 = vpack.c.bf16 %v857, %v856
        %v889 = vpack.c.bf16 %v859, %v858
        %v890 = vpack.c.bf16 %v861, %v860
        %v891 = vpack.c.bf16 %v863, %v862
        %v892 = vpack.c.bf16 %v865, %v864
        %v893 = vpack.c.bf16 %v867, %v866
        %v894 = vpack.c.bf16 %v869, %v868
        %v895 = vpack.c.bf16 %v871, %v870
        %v896 = vld [vmem:[#allocation3] sm:$0x3]
        %v898 = vperm.slane %v896, 0
        %v899 = vperm.slane %v896, 1
        %902 = vxpose.xlu0.c.b16.start [1/8] %v888, 128
        %903 = vxpose.xlu0.c.b16.cont [2/8] %v889, 128
        %904 = vxpose.xlu0.c.b16.cont [3/8] %v890, 128
        %905 = vxpose.xlu0.c.b16.cont [4/8] %v891, 128
        %906 = vxpose.xlu0.c.b16.cont [5/8] %v892, 128
        %907 = vxpose.xlu0.c.b16.cont [6/8] %v893, 128
        %908 = vxpose.xlu0.c.b16.cont [7/8] %v894, 128
        %909 = vxpose.xlu0.c.b16.end [8/8] %v895, 128
        %v910 = vpop.trf.xlu0
        %v911 = vpop.trf.xlu0
        %v912 = vpop.trf.xlu0
        %v913 = vpop.trf.xlu0
        %v914 = vpop.trf.xlu0
        %v915 = vpop.trf.xlu0
        %v916 = vpop.trf.xlu0
        %v917 = vpop.trf.xlu0
        %v934 = vunpack.c.l.b16 %v872
        %v935 = vunpack.c.h.b16 %v872
        %v936 = vunpack.c.l.b16 %v873
        %v937 = vunpack.c.h.b16 %v873
        %v938 = vunpack.c.l.b16 %v874
        %v939 = vunpack.c.h.b16 %v874
        %v940 = vunpack.c.l.b16 %v875
        %v941 = vunpack.c.h.b16 %v875
        %v942 = vunpack.c.l.b16 %v876
        %v943 = vunpack.c.h.b16 %v876
        %v944 = vunpack.c.l.b16 %v877
        %v945 = vunpack.c.h.b16 %v877
        %v946 = vunpack.c.l.b16 %v878
        %v947 = vunpack.c.h.b16 %v878
        %v948 = vunpack.c.l.b16 %v879
        %v949 = vunpack.c.h.b16 %v879
        %v950 = vunpack.c.l.b16 %v880
        %v951 = vunpack.c.h.b16 %v880
        %v952 = vunpack.c.l.b16 %v881
        %v953 = vunpack.c.h.b16 %v881
        %v954 = vunpack.c.l.b16 %v882
        %v955 = vunpack.c.h.b16 %v882
        %v956 = vunpack.c.l.b16 %v883
        %v957 = vunpack.c.h.b16 %v883
        %v958 = vunpack.c.l.b16 %v884
        %v959 = vunpack.c.h.b16 %v884
        %v960 = vunpack.c.l.b16 %v885
        %v961 = vunpack.c.h.b16 %v885
        %v962 = vunpack.c.l.b16 %v886
        %v963 = vunpack.c.h.b16 %v886
        %v964 = vunpack.c.l.b16 %v887
        %v965 = vunpack.c.h.b16 %v887
        %v966 = vpack.c.b16 %v936, %v934
        %v967 = vpack.c.b16 %v937, %v935
        %v968 = vpack.c.b16 %v940, %v938
        %v969 = vpack.c.b16 %v941, %v939
        %v970 = vpack.c.b16 %v944, %v942
        %v971 = vpack.c.b16 %v945, %v943
        %v972 = vpack.c.b16 %v948, %v946
        %v973 = vpack.c.b16 %v949, %v947
        %v974 = vpack.c.b16 %v952, %v950
        %v975 = vpack.c.b16 %v953, %v951
        %v976 = vpack.c.b16 %v956, %v954
        %v977 = vpack.c.b16 %v957, %v955
        %v978 = vpack.c.b16 %v960, %v958
        %v979 = vpack.c.b16 %v961, %v959
        %v980 = vpack.c.b16 %v964, %v962
        %v981 = vpack.c.b16 %v965, %v963
        %998 = vmatpush.bf16.msra.mxu0 %v980
        %999 = vmatpush.bf16.msra.mxu0 %v978
        %1000 = vmatpush.bf16.msra.mxu0 %v976
        %1001 = vmatpush.bf16.msra.mxu0 %v974
        %1002 = vmatpush.bf16.msra.mxu0 %v972
        %1003 = vmatpush.bf16.msra.mxu0 %v970
        %1004 = vmatpush.bf16.msra.mxu0 %v968
        %1005 = vmatpush.bf16.msra.mxu0 %v966
        %1006 = vmatmul.bf16.gmra.mxu0 %v910
        %v1007 = vpop.f32.mrf.mxu0
        %v1008 = vadd.f32 %v898, %v1007
        %v1009 = vpop.f32.mrf.mxu0
        %v1010 = vadd.f32 %v898, %v1009
        %1011 = vmatmul.bf16.gmra.mxu0 %v911
        %v1012 = vpop.f32.mrf.mxu0
        %v1013 = vadd.f32 %v898, %v1012
        %v1014 = vpop.f32.mrf.mxu0
        %v1015 = vadd.f32 %v898, %v1014
        %1016 = vmatmul.bf16.gmra.mxu0 %v912
        %v1017 = vpop.f32.mrf.mxu0
        %v1018 = vadd.f32 %v898, %v1017
        %v1019 = vpop.f32.mrf.mxu0
        %v1020 = vadd.f32 %v898, %v1019
        %1021 = vmatmul.bf16.gmra.mxu0 %v913
        %v1022 = vpop.f32.mrf.mxu0
        %v1023 = vadd.f32 %v898, %v1022
        %v1024 = vpop.f32.mrf.mxu0
        %v1025 = vadd.f32 %v898, %v1024
        %1026 = vmatmul.bf16.gmra.mxu0 %v914
        %v1027 = vpop.f32.mrf.mxu0
        %v1028 = vadd.f32 %v898, %v1027
        %v1029 = vpop.f32.mrf.mxu0
        %v1030 = vadd.f32 %v898, %v1029
        %1031 = vmatmul.bf16.gmra.mxu0 %v915
        %v1032 = vpop.f32.mrf.mxu0
        %v1033 = vadd.f32 %v898, %v1032
        %v1034 = vpop.f32.mrf.mxu0
        %v1035 = vadd.f32 %v898, %v1034
        %1036 = vmatmul.bf16.gmra.mxu0 %v916
        %v1037 = vpop.f32.mrf.mxu0
        %v1038 = vadd.f32 %v898, %v1037
        %v1039 = vpop.f32.mrf.mxu0
        %v1040 = vadd.f32 %v898, %v1039
        %1041 = vmatmul.bf16.gmra.mxu0 %v917
        %v1042 = vpop.f32.mrf.mxu0
        %v1043 = vadd.f32 %v898, %v1042
        %v1044 = vpop.f32.mrf.mxu0
        %v1045 = vadd.f32 %v898, %v1044
        %1046 = vdwg.mxu0
        %1047 = vmatpush.bf16.msra.mxu0 %v981
        %1048 = vmatpush.bf16.msra.mxu0 %v979
        %1049 = vmatpush.bf16.msra.mxu0 %v977
        %1050 = vmatpush.bf16.msra.mxu0 %v975
        %1051 = vmatpush.bf16.msra.mxu0 %v973
        %1052 = vmatpush.bf16.msra.mxu0 %v971
        %1053 = vmatpush.bf16.msra.mxu0 %v969
        %1054 = vmatpush.bf16.msra.mxu0 %v967
        %1055 = vmatmul.bf16.gmra.mxu0 %v910
        %v1056 = vpop.f32.mrf.mxu0
        %v1057 = vadd.f32 %v899, %v1056
        %v1058 = vpop.f32.mrf.mxu0
        %v1059 = vadd.f32 %v899, %v1058
        %1060 = vmatmul.bf16.gmra.mxu0 %v911
        %v1061 = vpop.f32.mrf.mxu0
        %v1062 = vadd.f32 %v899, %v1061
        %v1063 = vpop.f32.mrf.mxu0
        %v1064 = vadd.f32 %v899, %v1063
        %1065 = vmatmul.bf16.gmra.mxu0 %v912
        %v1066 = vpop.f32.mrf.mxu0
        %v1067 = vadd.f32 %v899, %v1066
        %v1068 = vpop.f32.mrf.mxu0
        %v1069 = vadd.f32 %v899, %v1068
        %1070 = vmatmul.bf16.gmra.mxu0 %v913
        %v1071 = vpop.f32.mrf.mxu0
        %v1072 = vadd.f32 %v899, %v1071
        %v1073 = vpop.f32.mrf.mxu0
        %v1074 = vadd.f32 %v899, %v1073
        %1075 = vmatmul.bf16.gmra.mxu0 %v914
        %v1076 = vpop.f32.mrf.mxu0
        %v1077 = vadd.f32 %v899, %v1076
        %v1078 = vpop.f32.mrf.mxu0
        %v1079 = vadd.f32 %v899, %v1078
        %1080 = vmatmul.bf16.gmra.mxu0 %v915
        %v1081 = vpop.f32.mrf.mxu0
        %v1082 = vadd.f32 %v899, %v1081
        %v1083 = vpop.f32.mrf.mxu0
        %v1084 = vadd.f32 %v899, %v1083
        %1085 = vmatmul.bf16.gmra.mxu0 %v916
        %v1086 = vpop.f32.mrf.mxu0
        %v1087 = vadd.f32 %v899, %v1086
        %v1088 = vpop.f32.mrf.mxu0
        %v1089 = vadd.f32 %v899, %v1088
        %1090 = vmatmul.bf16.gmra.mxu0 %v917
        %v1091 = vpop.f32.mrf.mxu0
        %v1092 = vadd.f32 %v899, %v1091
        %v1093 = vpop.f32.mrf.mxu0
        %v1094 = vadd.f32 %v899, %v1093
        %1095 = vdwg.mxu0
        %v1096 = vmax.f32 %v1008, %v1057
        %1097 = vmax.xlane.f32.xlu0 %v1096
        %v1098 = vpop.xlane.xlu0 %1097
        %v1099 = vmax.f32 %v1010, %v1059
        %1100 = vmax.xlane.f32.xlu0 %v1099
        %v1101 = vpop.xlane.xlu0 %1100
        %v1102 = vmax.f32 %v1013, %v1062
        %1103 = vmax.xlane.f32.xlu0 %v1102
        %v1104 = vpop.xlane.xlu0 %1103
        %v1105 = vmax.f32 %v1015, %v1064
        %1106 = vmax.xlane.f32.xlu0 %v1105
        %v1107 = vpop.xlane.xlu0 %1106
        %v1108 = vmax.f32 %v1018, %v1067
        %1109 = vmax.xlane.f32.xlu0 %v1108
        %v1110 = vpop.xlane.xlu0 %1109
        %v1111 = vmax.f32 %v1020, %v1069
        %1112 = vmax.xlane.f32.xlu0 %v1111
        %v1113 = vpop.xlane.xlu0 %1112
        %v1114 = vmax.f32 %v1023, %v1072
        %1115 = vmax.xlane.f32.xlu0 %v1114
        %v1116 = vpop.xlane.xlu0 %1115
        %v1117 = vmax.f32 %v1025, %v1074
        %1118 = vmax.xlane.f32.xlu0 %v1117
        %v1119 = vpop.xlane.xlu0 %1118
        %v1120 = vmax.f32 %v1028, %v1077
        %1121 = vmax.xlane.f32.xlu0 %v1120
        %v1122 = vpop.xlane.xlu0 %1121
        %v1123 = vmax.f32 %v1030, %v1079
        %1124 = vmax.xlane.f32.xlu0 %v1123
        %v1125 = vpop.xlane.xlu0 %1124
        %v1126 = vmax.f32 %v1033, %v1082
        %1127 = vmax.xlane.f32.xlu0 %v1126
        %v1128 = vpop.xlane.xlu0 %1127
        %v1129 = vmax.f32 %v1035, %v1084
        %1130 = vmax.xlane.f32.xlu0 %v1129
        %v1131 = vpop.xlane.xlu0 %1130
        %v1132 = vmax.f32 %v1038, %v1087
        %1133 = vmax.xlane.f32.xlu0 %v1132
        %v1134 = vpop.xlane.xlu0 %1133
        %v1135 = vmax.f32 %v1040, %v1089
        %1136 = vmax.xlane.f32.xlu0 %v1135
        %v1137 = vpop.xlane.xlu0 %1136
        %v1138 = vmax.f32 %v1043, %v1092
        %1139 = vmax.xlane.f32.xlu0 %v1138
        %v1140 = vpop.xlane.xlu0 %1139
        %v1141 = vmax.f32 %v1045, %v1094
        %1142 = vmax.xlane.f32.xlu0 %v1141
        %v1143 = vpop.xlane.xlu0 %1142
        %v1144 = vsub.f32 %v1008, %v1098
        %v1145 = vsub.f32 %v1057, %v1098
        %v1146 = vsub.f32 %v1010, %v1101
        %v1147 = vsub.f32 %v1059, %v1101
        %v1148 = vsub.f32 %v1013, %v1104
        %v1149 = vsub.f32 %v1062, %v1104
        %v1150 = vsub.f32 %v1015, %v1107
        %v1151 = vsub.f32 %v1064, %v1107
        %v1152 = vsub.f32 %v1018, %v1110
        %v1153 = vsub.f32 %v1067, %v1110
        %v1154 = vsub.f32 %v1020, %v1113
        %v1155 = vsub.f32 %v1069, %v1113
        %v1156 = vsub.f32 %v1023, %v1116
        %v1157 = vsub.f32 %v1072, %v1116
        %v1158 = vsub.f32 %v1025, %v1119
        %v1159 = vsub.f32 %v1074, %v1119
        %v1160 = vsub.f32 %v1028, %v1122
        %v1161 = vsub.f32 %v1077, %v1122
        %v1162 = vsub.f32 %v1030, %v1125
        %v1163 = vsub.f32 %v1079, %v1125
        %v1164 = vsub.f32 %v1033, %v1128
        %v1165 = vsub.f32 %v1082, %v1128
        %v1166 = vsub.f32 %v1035, %v1131
        %v1167 = vsub.f32 %v1084, %v1131
        %v1168 = vsub.f32 %v1038, %v1134
        %v1169 = vsub.f32 %v1087, %v1134
        %v1170 = vsub.f32 %v1040, %v1137
        %v1171 = vsub.f32 %v1089, %v1137
        %v1172 = vsub.f32 %v1043, %v1140
        %v1173 = vsub.f32 %v1092, %v1140
        %v1174 = vsub.f32 %v1045, %v1143
        %v1175 = vsub.f32 %v1094, %v1143
        %v1176 = vpack.c.bf16 %v1145, %v1144
        %v1177 = vpack.c.bf16 %v1147, %v1146
        %v1178 = vpack.c.bf16 %v1149, %v1148
        %v1179 = vpack.c.bf16 %v1151, %v1150
        %v1180 = vpack.c.bf16 %v1153, %v1152
        %v1181 = vpack.c.bf16 %v1155, %v1154
        %v1182 = vpack.c.bf16 %v1157, %v1156
        %v1183 = vpack.c.bf16 %v1159, %v1158
        %v1184 = vpack.c.bf16 %v1161, %v1160
        %v1185 = vpack.c.bf16 %v1163, %v1162
        %v1186 = vpack.c.bf16 %v1165, %v1164
        %v1187 = vpack.c.bf16 %v1167, %v1166
        %v1188 = vpack.c.bf16 %v1169, %v1168
        %v1189 = vpack.c.bf16 %v1171, %v1170
        %v1190 = vpack.c.bf16 %v1173, %v1172
        %v1191 = vpack.c.bf16 %v1175, %v1174
        %v1192 = vunpack.c.l.bf16 %v1176
        %v1193 = vunpack.c.h.bf16 %v1176
        %v1194 = vunpack.c.l.bf16 %v1177
        %v1195 = vunpack.c.h.bf16 %v1177
        %v1196 = vunpack.c.l.bf16 %v1178
        %v1197 = vunpack.c.h.bf16 %v1178
        %v1198 = vunpack.c.l.bf16 %v1179
        %v1199 = vunpack.c.h.bf16 %v1179
        %v1200 = vunpack.c.l.bf16 %v1180
        %v1201 = vunpack.c.h.bf16 %v1180
        %v1202 = vunpack.c.l.bf16 %v1181
        %v1203 = vunpack.c.h.bf16 %v1181
        %v1204 = vunpack.c.l.bf16 %v1182
        %v1205 = vunpack.c.h.bf16 %v1182
        %v1206 = vunpack.c.l.bf16 %v1183
        %v1207 = vunpack.c.h.bf16 %v1183
        %v1208 = vunpack.c.l.bf16 %v1184
        %v1209 = vunpack.c.h.bf16 %v1184
        %v1210 = vunpack.c.l.bf16 %v1185
        %v1211 = vunpack.c.h.bf16 %v1185
        %v1212 = vunpack.c.l.bf16 %v1186
        %v1213 = vunpack.c.h.bf16 %v1186
        %v1214 = vunpack.c.l.bf16 %v1187
        %v1215 = vunpack.c.h.bf16 %v1187
        %v1216 = vunpack.c.l.bf16 %v1188
        %v1217 = vunpack.c.h.bf16 %v1188
        %v1218 = vunpack.c.l.bf16 %v1189
        %v1219 = vunpack.c.h.bf16 %v1189
        %v1220 = vunpack.c.l.bf16 %v1190
        %v1221 = vunpack.c.h.bf16 %v1190
        %v1222 = vunpack.c.l.bf16 %v1191
        %v1223 = vunpack.c.h.bf16 %v1191
        %v1224 = vmul.f32 %v1192, 1.442695
        %v1225 = vpow.pop %v1224
        %v1226 = vmul.f32 %v1193, 1.442695
        %v1227 = vpow.pop %v1226
        %v1228 = vmul.f32 %v1194, 1.442695
        %v1229 = vpow.pop %v1228
        %v1230 = vmul.f32 %v1195, 1.442695
        %v1231 = vpow.pop %v1230
        %v1232 = vmul.f32 %v1196, 1.442695
        %v1233 = vpow.pop %v1232
        %v1234 = vmul.f32 %v1197, 1.442695
        %v1235 = vpow.pop %v1234
        %v1236 = vmul.f32 %v1198, 1.442695
        %v1237 = vpow.pop %v1236
        %v1238 = vmul.f32 %v1199, 1.442695
        %v1239 = vpow.pop %v1238
        %v1240 = vmul.f32 %v1200, 1.442695
        %v1241 = vpow.pop %v1240
        %v1242 = vmul.f32 %v1201, 1.442695
        %v1243 = vpow.pop %v1242
        %v1244 = vmul.f32 %v1202, 1.442695
        %v1245 = vpow.pop %v1244
        %v1246 = vmul.f32 %v1203, 1.442695
        %v1247 = vpow.pop %v1246
        %v1248 = vmul.f32 %v1204, 1.442695
        %v1249 = vpow.pop %v1248
        %v1250 = vmul.f32 %v1205, 1.442695
        %v1251 = vpow.pop %v1250
        %v1252 = vmul.f32 %v1206, 1.442695
        %v1253 = vpow.pop %v1252
        %v1254 = vmul.f32 %v1207, 1.442695
        %v1255 = vpow.pop %v1254
        %v1256 = vmul.f32 %v1208, 1.442695
        %v1257 = vpow.pop %v1256
        %v1258 = vmul.f32 %v1209, 1.442695
        %v1259 = vpow.pop %v1258
        %v1260 = vmul.f32 %v1210, 1.442695
        %v1261 = vpow.pop %v1260
        %v1262 = vmul.f32 %v1211, 1.442695
        %v1263 = vpow.pop %v1262
        %v1264 = vmul.f32 %v1212, 1.442695
        %v1265 = vpow.pop %v1264
        %v1266 = vmul.f32 %v1213, 1.442695
        %v1267 = vpow.pop %v1266
        %v1268 = vmul.f32 %v1214, 1.442695
        %v1269 = vpow.pop %v1268
        %v1270 = vmul.f32 %v1215, 1.442695
        %v1271 = vpow.pop %v1270
        %v1272 = vmul.f32 %v1216, 1.442695
        %v1273 = vpow.pop %v1272
        %v1274 = vmul.f32 %v1217, 1.442695
        %v1275 = vpow.pop %v1274
        %v1276 = vmul.f32 %v1218, 1.442695
        %v1277 = vpow.pop %v1276
        %v1278 = vmul.f32 %v1219, 1.442695
        %v1279 = vpow.pop %v1278
        %v1280 = vmul.f32 %v1220, 1.442695
        %v1281 = vpow.pop %v1280
        %v1282 = vmul.f32 %v1221, 1.442695
        %v1283 = vpow.pop %v1282
        %v1284 = vmul.f32 %v1222, 1.442695
        %v1285 = vpow.pop %v1284
        %v1286 = vmul.f32 %v1223, 1.442695
        %v1287 = vpow.pop %v1286
        %v1288 = vpack.c.bf16 %v1227, %v1225
        %v1289 = vpack.c.bf16 %v1231, %v1229
        %v1290 = vpack.c.bf16 %v1235, %v1233
        %v1291 = vpack.c.bf16 %v1239, %v1237
        %v1292 = vpack.c.bf16 %v1243, %v1241
        %v1293 = vpack.c.bf16 %v1247, %v1245
        %v1294 = vpack.c.bf16 %v1251, %v1249
        %v1295 = vpack.c.bf16 %v1255, %v1253
        %v1296 = vpack.c.bf16 %v1259, %v1257
        %v1297 = vpack.c.bf16 %v1263, %v1261
        %v1298 = vpack.c.bf16 %v1267, %v1265
        %v1299 = vpack.c.bf16 %v1271, %v1269
        %v1300 = vpack.c.bf16 %v1275, %v1273
        %v1301 = vpack.c.bf16 %v1279, %v1277
        %v1302 = vpack.c.bf16 %v1283, %v1281
        %v1303 = vpack.c.bf16 %v1287, %v1285
        %v1304 = vunpack.c.l.bf16 %v1288
        %v1305 = vunpack.c.h.bf16 %v1288
        %v1306 = vunpack.c.l.bf16 %v1289
        %v1307 = vunpack.c.h.bf16 %v1289
        %v1308 = vunpack.c.l.bf16 %v1290
        %v1309 = vunpack.c.h.bf16 %v1290
        %v1310 = vunpack.c.l.bf16 %v1291
        %v1311 = vunpack.c.h.bf16 %v1291
        %v1312 = vunpack.c.l.bf16 %v1292
        %v1313 = vunpack.c.h.bf16 %v1292
        %v1314 = vunpack.c.l.bf16 %v1293
        %v1315 = vunpack.c.h.bf16 %v1293
        %v1316 = vunpack.c.l.bf16 %v1294
        %v1317 = vunpack.c.h.bf16 %v1294
        %v1318 = vunpack.c.l.bf16 %v1295
        %v1319 = vunpack.c.h.bf16 %v1295
        %v1320 = vunpack.c.l.bf16 %v1296
        %v1321 = vunpack.c.h.bf16 %v1296
        %v1322 = vunpack.c.l.bf16 %v1297
        %v1323 = vunpack.c.h.bf16 %v1297
        %v1324 = vunpack.c.l.bf16 %v1298
        %v1325 = vunpack.c.h.bf16 %v1298
        %v1326 = vunpack.c.l.bf16 %v1299
        %v1327 = vunpack.c.h.bf16 %v1299
        %v1328 = vunpack.c.l.bf16 %v1300
        %v1329 = vunpack.c.h.bf16 %v1300
        %v1330 = vunpack.c.l.bf16 %v1301
        %v1331 = vunpack.c.h.bf16 %v1301
        %v1332 = vunpack.c.l.bf16 %v1302
        %v1333 = vunpack.c.h.bf16 %v1302
        %v1334 = vunpack.c.l.bf16 %v1303
        %v1335 = vunpack.c.h.bf16 %v1303
        %v1336 = vadd.f32 %v1304, %v1305
        %1337 = vadd.xlane.f32.xlu0 %v1336
        %v1338 = vpop.xlane.xlu0 %1337
        %v1339 = vadd.f32 %v1306, %v1307
        %1340 = vadd.xlane.f32.xlu0 %v1339
        %v1341 = vpop.xlane.xlu0 %1340
        %v1342 = vadd.f32 %v1308, %v1309
        %1343 = vadd.xlane.f32.xlu0 %v1342
        %v1344 = vpop.xlane.xlu0 %1343
        %v1345 = vadd.f32 %v1310, %v1311
        %1346 = vadd.xlane.f32.xlu0 %v1345
        %v1347 = vpop.xlane.xlu0 %1346
        %v1348 = vadd.f32 %v1312, %v1313
        %1349 = vadd.xlane.f32.xlu0 %v1348
        %v1350 = vpop.xlane.xlu0 %1349
        %v1351 = vadd.f32 %v1314, %v1315
        %1352 = vadd.xlane.f32.xlu0 %v1351
        %v1353 = vpop.xlane.xlu0 %1352
        %v1354 = vadd.f32 %v1316, %v1317
        %1355 = vadd.xlane.f32.xlu0 %v1354
        %v1356 = vpop.xlane.xlu0 %1355
        %v1357 = vadd.f32 %v1318, %v1319
        %1358 = vadd.xlane.f32.xlu0 %v1357
        %v1359 = vpop.xlane.xlu0 %1358
        %v1360 = vadd.f32 %v1320, %v1321
        %1361 = vadd.xlane.f32.xlu0 %v1360
        %v1362 = vpop.xlane.xlu0 %1361
        %v1363 = vadd.f32 %v1322, %v1323
        %1364 = vadd.xlane.f32.xlu0 %v1363
        %v1365 = vpop.xlane.xlu0 %1364
        %v1366 = vadd.f32 %v1324, %v1325
        %1367 = vadd.xlane.f32.xlu0 %v1366
        %v1368 = vpop.xlane.xlu0 %1367
        %v1369 = vadd.f32 %v1326, %v1327
        %1370 = vadd.xlane.f32.xlu0 %v1369
        %v1371 = vpop.xlane.xlu0 %1370
        %v1372 = vadd.f32 %v1328, %v1329
        %1373 = vadd.xlane.f32.xlu0 %v1372
        %v1374 = vpop.xlane.xlu0 %1373
        %v1375 = vadd.f32 %v1330, %v1331
        %1376 = vadd.xlane.f32.xlu0 %v1375
        %v1377 = vpop.xlane.xlu0 %1376
        %v1378 = vadd.f32 %v1332, %v1333
        %1379 = vadd.xlane.f32.xlu0 %v1378
        %v1380 = vpop.xlane.xlu0 %1379
        %v1381 = vadd.f32 %v1334, %v1335
        %1382 = vadd.xlane.f32.xlu0 %v1381
        %v1383 = vpop.xlane.xlu0 %1382
        %v1384 = vrcp.pop %v1338
        %v1385 = vrcp.pop %v1341
        %v1386 = vrcp.pop %v1344
        %v1387 = vrcp.pop %v1347
        %v1388 = vrcp.pop %v1350
        %v1389 = vrcp.pop %v1353
        %v1390 = vrcp.pop %v1356
        %v1391 = vrcp.pop %v1359
        %v1392 = vrcp.pop %v1362
        %v1393 = vrcp.pop %v1365
        %v1394 = vrcp.pop %v1368
        %v1395 = vrcp.pop %v1371
        %v1396 = vrcp.pop %v1374
        %v1397 = vrcp.pop %v1377
        %v1398 = vrcp.pop %v1380
        %v1399 = vrcp.pop %v1383
        %v1400 = vmul.f32 %v1304, %v1384
        %v1401 = vmul.f32 %v1305, %v1384
        %v1402 = vmul.f32 %v1306, %v1385
        %v1403 = vmul.f32 %v1307, %v1385
        %v1404 = vmul.f32 %v1308, %v1386
        %v1405 = vmul.f32 %v1309, %v1386
        %v1406 = vmul.f32 %v1310, %v1387
        %v1407 = vmul.f32 %v1311, %v1387
        %v1408 = vmul.f32 %v1312, %v1388
        %v1409 = vmul.f32 %v1313, %v1388
        %v1410 = vmul.f32 %v1314, %v1389
        %v1411 = vmul.f32 %v1315, %v1389
        %v1412 = vmul.f32 %v1316, %v1390
        %v1413 = vmul.f32 %v1317, %v1390
        %v1414 = vmul.f32 %v1318, %v1391
        %v1415 = vmul.f32 %v1319, %v1391
        %v1416 = vmul.f32 %v1320, %v1392
        %v1417 = vmul.f32 %v1321, %v1392
        %v1418 = vmul.f32 %v1322, %v1393
        %v1419 = vmul.f32 %v1323, %v1393
        %v1420 = vmul.f32 %v1324, %v1394
        %v1421 = vmul.f32 %v1325, %v1394
        %v1422 = vmul.f32 %v1326, %v1395
        %v1423 = vmul.f32 %v1327, %v1395
        %v1424 = vmul.f32 %v1328, %v1396
        %v1425 = vmul.f32 %v1329, %v1396
        %v1426 = vmul.f32 %v1330, %v1397
        %v1427 = vmul.f32 %v1331, %v1397
        %v1428 = vmul.f32 %v1332, %v1398
        %v1429 = vmul.f32 %v1333, %v1398
        %v1430 = vmul.f32 %v1334, %v1399
        %v1431 = vmul.f32 %v1335, %v1399
        %v1432 = vpack.c.bf16 %v1402, %v1400
        %v1433 = vpack.c.bf16 %v1403, %v1401
        %v1434 = vpack.c.bf16 %v1406, %v1404
        %v1435 = vpack.c.bf16 %v1407, %v1405
        %v1436 = vpack.c.bf16 %v1410, %v1408
        %v1437 = vpack.c.bf16 %v1411, %v1409
        %v1438 = vpack.c.bf16 %v1414, %v1412
        %v1439 = vpack.c.bf16 %v1415, %v1413
        %v1440 = vpack.c.bf16 %v1418, %v1416
        %v1441 = vpack.c.bf16 %v1419, %v1417
        %v1442 = vpack.c.bf16 %v1422, %v1420
        %v1443 = vpack.c.bf16 %v1423, %v1421
        %v1444 = vpack.c.bf16 %v1426, %v1424
        %v1445 = vpack.c.bf16 %v1427, %v1425
        %v1446 = vpack.c.bf16 %v1430, %v1428
        %v1447 = vpack.c.bf16 %v1431, %v1429
        %v1448 = vld [vmem:[#allocation2 + $0x80] sm:$0xff]
        %v1449 = vld [vmem:[#allocation2 + $0x88] sm:$0xff]
        %v1450 = vld [vmem:[#allocation2 + $0x90] sm:$0xff]
        %v1451 = vld [vmem:[#allocation2 + $0x98] sm:$0xff]
        %v1452 = vld [vmem:[#allocation2 + $0xa0] sm:$0xff]
        %v1453 = vld [vmem:[#allocation2 + $0xa8] sm:$0xff]
        %v1454 = vld [vmem:[#allocation2 + $0xb0] sm:$0xff]
        %v1455 = vld [vmem:[#allocation2 + $0xb8] sm:$0xff]
        %v1456 = vld [vmem:[#allocation2 + $0xc0] sm:$0xff]
        %v1457 = vld [vmem:[#allocation2 + $0xc8] sm:$0xff]
        %v1458 = vld [vmem:[#allocation2 + $0xd0] sm:$0xff]
        %v1459 = vld [vmem:[#allocation2 + $0xd8] sm:$0xff]
        %v1460 = vld [vmem:[#allocation2 + $0xe0] sm:$0xff]
        %v1461 = vld [vmem:[#allocation2 + $0xe8] sm:$0xff]
        %v1462 = vld [vmem:[#allocation2 + $0xf0] sm:$0xff]
        %v1463 = vld [vmem:[#allocation2 + $0xf8] sm:$0xff]
        %v1480 = vunpack.c.l.b16 %v1448
        %v1481 = vunpack.c.h.b16 %v1448
        %v1482 = vunpack.c.l.b16 %v1449
        %v1483 = vunpack.c.h.b16 %v1449
        %v1484 = vunpack.c.l.b16 %v1450
        %v1485 = vunpack.c.h.b16 %v1450
        %v1486 = vunpack.c.l.b16 %v1451
        %v1487 = vunpack.c.h.b16 %v1451
        %v1488 = vunpack.c.l.b16 %v1452
        %v1489 = vunpack.c.h.b16 %v1452
        %v1490 = vunpack.c.l.b16 %v1453
        %v1491 = vunpack.c.h.b16 %v1453
        %v1492 = vunpack.c.l.b16 %v1454
        %v1493 = vunpack.c.h.b16 %v1454
        %v1494 = vunpack.c.l.b16 %v1455
        %v1495 = vunpack.c.h.b16 %v1455
        %v1496 = vunpack.c.l.b16 %v1456
        %v1497 = vunpack.c.h.b16 %v1456
        %v1498 = vunpack.c.l.b16 %v1457
        %v1499 = vunpack.c.h.b16 %v1457
        %v1500 = vunpack.c.l.b16 %v1458
        %v1501 = vunpack.c.h.b16 %v1458
        %v1502 = vunpack.c.l.b16 %v1459
        %v1503 = vunpack.c.h.b16 %v1459
        %v1504 = vunpack.c.l.b16 %v1460
        %v1505 = vunpack.c.h.b16 %v1460
        %v1506 = vunpack.c.l.b16 %v1461
        %v1507 = vunpack.c.h.b16 %v1461
        %v1508 = vunpack.c.l.b16 %v1462
        %v1509 = vunpack.c.h.b16 %v1462
        %v1510 = vunpack.c.l.b16 %v1463
        %v1511 = vunpack.c.h.b16 %v1463
        %v1512 = vpack.c.b16 %v1482, %v1480
        %v1513 = vpack.c.b16 %v1483, %v1481
        %v1514 = vpack.c.b16 %v1486, %v1484
        %v1515 = vpack.c.b16 %v1487, %v1485
        %v1516 = vpack.c.b16 %v1490, %v1488
        %v1517 = vpack.c.b16 %v1491, %v1489
        %v1518 = vpack.c.b16 %v1494, %v1492
        %v1519 = vpack.c.b16 %v1495, %v1493
        %v1520 = vpack.c.b16 %v1498, %v1496
        %v1521 = vpack.c.b16 %v1499, %v1497
        %v1522 = vpack.c.b16 %v1502, %v1500
        %v1523 = vpack.c.b16 %v1503, %v1501
        %v1524 = vpack.c.b16 %v1506, %v1504
        %v1525 = vpack.c.b16 %v1507, %v1505
        %v1526 = vpack.c.b16 %v1510, %v1508
        %v1527 = vpack.c.b16 %v1511, %v1509
        %1544 = vmatpush.bf16.xpose.msra.mxu0 %v1446
        %1545 = vmatpush.bf16.xpose.msra.mxu0 %v1444
        %1546 = vmatpush.bf16.xpose.msra.mxu0 %v1442
        %1547 = vmatpush.bf16.xpose.msra.mxu0 %v1440
        %1548 = vmatpush.bf16.xpose.msra.mxu0 %v1438
        %1549 = vmatpush.bf16.xpose.msra.mxu0 %v1436
        %1550 = vmatpush.bf16.xpose.msra.mxu0 %v1434
        %1551 = vmatpush.bf16.xpose.msra.mxu0 %v1432
        %1552 = vmatmul.bf16.gmra.mxu0 %v1512
        %v1553 = vpop.f32.mrf.mxu0
        %v1554 = vadd.f32 0.0, %v1553
        %v1555 = vpop.f32.mrf.mxu0
        %v1556 = vadd.f32 0.0, %v1555
        %1557 = vmatmul.bf16.gmra.mxu0 %v1514
        %v1558 = vpop.f32.mrf.mxu0
        %v1559 = vadd.f32 0.0, %v1558
        %v1560 = vpop.f32.mrf.mxu0
        %v1561 = vadd.f32 0.0, %v1560
        %1562 = vmatmul.bf16.gmra.mxu0 %v1516
        %v1563 = vpop.f32.mrf.mxu0
        %v1564 = vadd.f32 0.0, %v1563
        %v1565 = vpop.f32.mrf.mxu0
        %v1566 = vadd.f32 0.0, %v1565
        %1567 = vmatmul.bf16.gmra.mxu0 %v1518
        %v1568 = vpop.f32.mrf.mxu0
        %v1569 = vadd.f32 0.0, %v1568
        %v1570 = vpop.f32.mrf.mxu0
        %v1571 = vadd.f32 0.0, %v1570
        %1572 = vmatmul.bf16.gmra.mxu0 %v1520
        %v1573 = vpop.f32.mrf.mxu0
        %v1574 = vadd.f32 0.0, %v1573
        %v1575 = vpop.f32.mrf.mxu0
        %v1576 = vadd.f32 0.0, %v1575
        %1577 = vmatmul.bf16.gmra.mxu0 %v1522
        %v1578 = vpop.f32.mrf.mxu0
        %v1579 = vadd.f32 0.0, %v1578
        %v1580 = vpop.f32.mrf.mxu0
        %v1581 = vadd.f32 0.0, %v1580
        %1582 = vmatmul.bf16.gmra.mxu0 %v1524
        %v1583 = vpop.f32.mrf.mxu0
        %v1584 = vadd.f32 0.0, %v1583
        %v1585 = vpop.f32.mrf.mxu0
        %v1586 = vadd.f32 0.0, %v1585
        %1587 = vmatmul.bf16.gmra.mxu0 %v1526
        %v1588 = vpop.f32.mrf.mxu0
        %v1589 = vadd.f32 0.0, %v1588
        %v1590 = vpop.f32.mrf.mxu0
        %v1591 = vadd.f32 0.0, %v1590
        %1592 = vdwg.mxu0
        %1593 = vmatpush.bf16.xpose.msra.mxu0 %v1447
        %1594 = vmatpush.bf16.xpose.msra.mxu0 %v1445
        %1595 = vmatpush.bf16.xpose.msra.mxu0 %v1443
        %1596 = vmatpush.bf16.xpose.msra.mxu0 %v1441
        %1597 = vmatpush.bf16.xpose.msra.mxu0 %v1439
        %1598 = vmatpush.bf16.xpose.msra.mxu0 %v1437
        %1599 = vmatpush.bf16.xpose.msra.mxu0 %v1435
        %1600 = vmatpush.bf16.xpose.msra.mxu0 %v1433
        %1601 = vmatmul.bf16.gmra.mxu0 %v1513
        %v1602 = vpop.f32.mrf.mxu0
        %v1603 = vadd.f32 %v1554, %v1602
        %v1604 = vpop.f32.mrf.mxu0
        %v1605 = vadd.f32 %v1556, %v1604
        %1606 = vmatmul.bf16.gmra.mxu0 %v1515
        %v1607 = vpop.f32.mrf.mxu0
        %v1608 = vadd.f32 %v1559, %v1607
        %v1609 = vpop.f32.mrf.mxu0
        %v1610 = vadd.f32 %v1561, %v1609
        %1611 = vmatmul.bf16.gmra.mxu0 %v1517
        %v1612 = vpop.f32.mrf.mxu0
        %v1613 = vadd.f32 %v1564, %v1612
        %v1614 = vpop.f32.mrf.mxu0
        %v1615 = vadd.f32 %v1566, %v1614
        %1616 = vmatmul.bf16.gmra.mxu0 %v1519
        %v1617 = vpop.f32.mrf.mxu0
        %v1618 = vadd.f32 %v1569, %v1617
        %v1619 = vpop.f32.mrf.mxu0
        %v1620 = vadd.f32 %v1571, %v1619
        %1621 = vmatmul.bf16.gmra.mxu0 %v1521
        %v1622 = vpop.f32.mrf.mxu0
        %v1623 = vadd.f32 %v1574, %v1622
        %v1624 = vpop.f32.mrf.mxu0
        %v1625 = vadd.f32 %v1576, %v1624
        %1626 = vmatmul.bf16.gmra.mxu0 %v1523
        %v1627 = vpop.f32.mrf.mxu0
        %v1628 = vadd.f32 %v1579, %v1627
        %v1629 = vpop.f32.mrf.mxu0
        %v1630 = vadd.f32 %v1581, %v1629
        %1631 = vmatmul.bf16.gmra.mxu0 %v1525
        %v1632 = vpop.f32.mrf.mxu0
        %v1633 = vadd.f32 %v1584, %v1632
        %v1634 = vpop.f32.mrf.mxu0
        %v1635 = vadd.f32 %v1586, %v1634
        %1636 = vmatmul.bf16.gmra.mxu0 %v1527
        %v1637 = vpop.f32.mrf.mxu0
        %v1638 = vadd.f32 %v1589, %v1637
        %v1639 = vpop.f32.mrf.mxu0
        %v1640 = vadd.f32 %v1591, %v1639
        %1641 = vdwg.mxu0
        %s1642 = sld [smem:[#allocation4]]
        %v1643 = vstv %s1642
        %v1644 = vmul.f32 %v1643, %v1603
        %v1645 = vmul.f32 %v1643, %v1605
        %v1646 = vmul.f32 %v1643, %v1608
        %v1647 = vmul.f32 %v1643, %v1610
        %v1648 = vmul.f32 %v1643, %v1613
        %v1649 = vmul.f32 %v1643, %v1615
        %v1650 = vmul.f32 %v1643, %v1618
        %v1651 = vmul.f32 %v1643, %v1620
        %v1652 = vmul.f32 %v1643, %v1623
        %v1653 = vmul.f32 %v1643, %v1625
        %v1654 = vmul.f32 %v1643, %v1628
        %v1655 = vmul.f32 %v1643, %v1630
        %v1656 = vmul.f32 %v1643, %v1633
        %v1657 = vmul.f32 %v1643, %v1635
        %v1658 = vmul.f32 %v1643, %v1638
        %v1659 = vmul.f32 %v1643, %v1640
        %v1660 = vadd.f32 %v1644, %v856
        %v1661 = vadd.f32 %v1645, %v857
        %v1662 = vadd.f32 %v1646, %v858
        %v1663 = vadd.f32 %v1647, %v859
        %v1664 = vadd.f32 %v1648, %v860
        %v1665 = vadd.f32 %v1649, %v861
        %v1666 = vadd.f32 %v1650, %v862
        %v1667 = vadd.f32 %v1651, %v863
        %v1668 = vadd.f32 %v1652, %v864
        %v1669 = vadd.f32 %v1653, %v865
        %v1670 = vadd.f32 %v1654, %v866
        %v1671 = vadd.f32 %v1655, %v867
        %v1672 = vadd.f32 %v1656, %v868
        %v1673 = vadd.f32 %v1657, %v869
        %v1674 = vadd.f32 %v1658, %v870
        %v1675 = vadd.f32 %v1659, %v871
        %1676 = vst [vmem:[%s201] sm:$0xff] %v1660
        %1677 = vst [vmem:[%s201 + $0x8] sm:$0xff] %v1661
        %1678 = vst [vmem:[%s201 + $0x10] sm:$0xff] %v1662
        %1679 = vst [vmem:[%s201 + $0x18] sm:$0xff] %v1663
        %1680 = vst [vmem:[%s201 + $0x20] sm:$0xff] %v1664
        %1681 = vst [vmem:[%s201 + $0x28] sm:$0xff] %v1665
        %1682 = vst [vmem:[%s201 + $0x30] sm:$0xff] %v1666
        %1683 = vst [vmem:[%s201 + $0x38] sm:$0xff] %v1667
        %1684 = vst [vmem:[%s201 + $0x40] sm:$0xff] %v1668
        %1685 = vst [vmem:[%s201 + $0x48] sm:$0xff] %v1669
        %1686 = vst [vmem:[%s201 + $0x50] sm:$0xff] %v1670
        %1687 = vst [vmem:[%s201 + $0x58] sm:$0xff] %v1671
        %1688 = vst [vmem:[%s201 + $0x60] sm:$0xff] %v1672
        %1689 = vst [vmem:[%s201 + $0x68] sm:$0xff] %v1673
        %1690 = vst [vmem:[%s201 + $0x70] sm:$0xff] %v1674
        %1691 = vst [vmem:[%s201 + $0x78] sm:$0xff] %v1675
        %s1692 = sand.u32 %s127, 1
        %s1693 = sand.u32 %s127, 1
        %s1694 = smul.addr %s1693, 128
        %s1695 = scalar_lea.vmem [#allocation5], %s1694
        // Predicated region
        $region41: #{self_attention_pallas.1} parent=35 // pred_check
          %p1696 = pneg %p137
        $region42: #{self_attention_pallas.1} parent=35 // pred_check_branch
          %1698 = sbr.rel (%p1696) target = $region44
        $region43: #{self_attention_pallas.1} parent=35 // pred_region
          %s1699 = smul.addr %s20, 32
          %s1700 = sadd.s32 %s21, %s1699
          %s1701 = smul.addr %s1700, 8
          %s1702 = scalar_lea.vmem %s4, %s1701
          // Predicated region
          $region45: #{self_attention_pallas.1} parent=43 // pred_check
            _
          $region46: #{self_attention_pallas.1} parent=43 // pred_check_branch
            %1704 = sbr.rel (0) target = $region48
          $region47: #{self_attention_pallas.1} parent=43 // pred_region
            // Predicated region
            $region49: #{self_attention_pallas.1} parent=47 // pred_check
              _
            $region50: #{self_attention_pallas.1} parent=47 // pred_check_branch
              %1706 = sbr.rel (0) target = $region52
            $region51: #{self_attention_pallas.1} parent=47 // pred_region
              // Predicated region
              $region64: #{self_attention_pallas.1} parent=51 // pred_check
                _
              $region65: #{self_attention_pallas.1} parent=51 // pred_check_branch
                %1752 = sbr.rel (0) target = $region67
              $region66: #{self_attention_pallas.1} parent=51 // pred_region
                loop: start=0, step=1, limit=1
                $region68: #{self_attention_pallas.1} parent=66 // loop_pre_header
                  _
                $region69: #{self_attention_pallas.1} parent=66 // loop_header
                  %s1754 = sphi 0, %s1758
                  %p1755 = scmp.ge.s32.totalorder %s1754, 1
                  %s1759 = sphi %s1695, %s1695
                  %s1760 = sphi %s1702, %s1702
                $region70: #{self_attention_pallas.1} parent=66 // loop_header_branch
                  %1757 = sbr.rel (%p1755) target = $region74
                $region71: #{self_attention_pallas.1} parent=66 // loop_body
                  %v1761 = vld [vmem:[%s1759] sm:$0xff]
                  %1762 = vst [vmem:[%s1760] sm:$0xff] %v1761
                  %v1763 = vld [vmem:[%s1759 + $0x8] sm:$0xff]
                  %1764 = vst [vmem:[%s1760 + $0x10] sm:$0xff] %v1763
                  %v1765 = vld [vmem:[%s1759 + $0x10] sm:$0xff]
                  %1766 = vst [vmem:[%s1760 + $0x20] sm:$0xff] %v1765
                  %v1767 = vld [vmem:[%s1759 + $0x18] sm:$0xff]
                  %1768 = vst [vmem:[%s1760 + $0x30] sm:$0xff] %v1767
                  %v1769 = vld [vmem:[%s1759 + $0x20] sm:$0xff]
                  %1770 = vst [vmem:[%s1760 + $0x40] sm:$0xff] %v1769
                  %v1771 = vld [vmem:[%s1759 + $0x28] sm:$0xff]
                  %1772 = vst [vmem:[%s1760 + $0x50] sm:$0xff] %v1771
                  %v1773 = vld [vmem:[%s1759 + $0x30] sm:$0xff]
                  %1774 = vst [vmem:[%s1760 + $0x60] sm:$0xff] %v1773
                  %v1775 = vld [vmem:[%s1759 + $0x38] sm:$0xff]
                  %1776 = vst [vmem:[%s1760 + $0x70] sm:$0xff] %v1775
                  %v1777 = vld [vmem:[%s1759 + $0x40] sm:$0xff]
                  %1778 = vst [vmem:[%s1760 + $0x80] sm:$0xff] %v1777
                  %v1779 = vld [vmem:[%s1759 + $0x48] sm:$0xff]
                  %1780 = vst [vmem:[%s1760 + $0x90] sm:$0xff] %v1779
                  %v1781 = vld [vmem:[%s1759 + $0x50] sm:$0xff]
                  %1782 = vst [vmem:[%s1760 + $0xa0] sm:$0xff] %v1781
                  %v1783 = vld [vmem:[%s1759 + $0x58] sm:$0xff]
                  %1784 = vst [vmem:[%s1760 + $0xb0] sm:$0xff] %v1783
                  %v1785 = vld [vmem:[%s1759 + $0x60] sm:$0xff]
                  %1786 = vst [vmem:[%s1760 + $0xc0] sm:$0xff] %v1785
                  %v1787 = vld [vmem:[%s1759 + $0x68] sm:$0xff]
                  %1788 = vst [vmem:[%s1760 + $0xd0] sm:$0xff] %v1787
                  %v1789 = vld [vmem:[%s1759 + $0x70] sm:$0xff]
                  %1790 = vst [vmem:[%s1760 + $0xe0] sm:$0xff] %v1789
                  %v1791 = vld [vmem:[%s1759 + $0x78] sm:$0xff]
                  %1792 = vst [vmem:[%s1760 + $0xf0] sm:$0xff] %v1791
                $region72: #{self_attention_pallas.1} parent=66 // loop_footer
                  %s1758 = sadd.s32 1, %s1754
                $region73: #{self_attention_pallas.1} parent=66 // loop_footer_branch
                  %1753 = sbr.rel target = $region69
                $region74: #{self_attention_pallas.1} parent=66 // loop_exit
                  _
              $region67: #{self_attention_pallas.1} parent=51 // pred_fallthru
                _
              // Predicated region
              $region75: #{self_attention_pallas.1} parent=51 // pred_check
                _
              $region76: #{self_attention_pallas.1} parent=51 // pred_check_branch
                %1794 = sbr.rel target = $region78
              $region77: #{self_attention_pallas.1} parent=51 // pred_region
                _
              $region78: #{self_attention_pallas.1} parent=51 // pred_fallthru
                _
            $region52: #{self_attention_pallas.1} parent=47 // pred_fallthru
              _
            // Predicated region
            $region53: #{self_attention_pallas.1} parent=47 // pred_check
              _
            $region54: #{self_attention_pallas.1} parent=47 // pred_check_branch
              %1708 = sbr.rel target = $region56
            $region55: #{self_attention_pallas.1} parent=47 // pred_region
              %s1710 = ssub.s32 256, 1
              loop: start=0, step=1, limit=1
              $region57: #{self_attention_pallas.1} parent=55 // loop_pre_header
                _
              $region58: #{self_attention_pallas.1} parent=55 // loop_header
                %s1712 = sphi 0, %s1716
                %p1713 = scmp.ge.s32.totalorder %s1712, 1
                %s1717 = sphi %s1695, %s1695
                %s1718 = sphi %s1702, %s1702
              $region59: #{self_attention_pallas.1} parent=55 // loop_header_branch
                %1715 = sbr.rel (%p1713) target = $region63
              $region60: #{self_attention_pallas.1} parent=55 // loop_body
                %v1719 = vld [vmem:[%s1717] sm:%s1710]
                %1720 = vst [vmem:[%s1718] sm:%s1710] %v1719
                %v1721 = vld [vmem:[%s1717 + $0x8] sm:%s1710]
                %1722 = vst [vmem:[%s1718 + $0x10] sm:%s1710] %v1721
                %v1723 = vld [vmem:[%s1717 + $0x10] sm:%s1710]
                %1724 = vst [vmem:[%s1718 + $0x20] sm:%s1710] %v1723
                %v1725 = vld [vmem:[%s1717 + $0x18] sm:%s1710]
                %1726 = vst [vmem:[%s1718 + $0x30] sm:%s1710] %v1725
                %v1727 = vld [vmem:[%s1717 + $0x20] sm:%s1710]
                %1728 = vst [vmem:[%s1718 + $0x40] sm:%s1710] %v1727
                %v1729 = vld [vmem:[%s1717 + $0x28] sm:%s1710]
                %1730 = vst [vmem:[%s1718 + $0x50] sm:%s1710] %v1729
                %v1731 = vld [vmem:[%s1717 + $0x30] sm:%s1710]
                %1732 = vst [vmem:[%s1718 + $0x60] sm:%s1710] %v1731
                %v1733 = vld [vmem:[%s1717 + $0x38] sm:%s1710]
                %1734 = vst [vmem:[%s1718 + $0x70] sm:%s1710] %v1733
                %v1735 = vld [vmem:[%s1717 + $0x40] sm:%s1710]
                %1736 = vst [vmem:[%s1718 + $0x80] sm:%s1710] %v1735
                %v1737 = vld [vmem:[%s1717 + $0x48] sm:%s1710]
                %1738 = vst [vmem:[%s1718 + $0x90] sm:%s1710] %v1737
                %v1739 = vld [vmem:[%s1717 + $0x50] sm:%s1710]
                %1740 = vst [vmem:[%s1718 + $0xa0] sm:%s1710] %v1739
                %v1741 = vld [vmem:[%s1717 + $0x58] sm:%s1710]
                %1742 = vst [vmem:[%s1718 + $0xb0] sm:%s1710] %v1741
                %v1743 = vld [vmem:[%s1717 + $0x60] sm:%s1710]
                %1744 = vst [vmem:[%s1718 + $0xc0] sm:%s1710] %v1743
                %v1745 = vld [vmem:[%s1717 + $0x68] sm:%s1710]
                %1746 = vst [vmem:[%s1718 + $0xd0] sm:%s1710] %v1745
                %v1747 = vld [vmem:[%s1717 + $0x70] sm:%s1710]
                %1748 = vst [vmem:[%s1718 + $0xe0] sm:%s1710] %v1747
                %v1749 = vld [vmem:[%s1717 + $0x78] sm:%s1710]
                %1750 = vst [vmem:[%s1718 + $0xf0] sm:%s1710] %v1749
              $region61: #{self_attention_pallas.1} parent=55 // loop_footer
                %s1716 = sadd.s32 1, %s1712
              $region62: #{self_attention_pallas.1} parent=55 // loop_footer_branch
                %1711 = sbr.rel target = $region58
              $region63: #{self_attention_pallas.1} parent=55 // loop_exit
                _
            $region56: #{self_attention_pallas.1} parent=47 // pred_fallthru
              _
          $region48: #{self_attention_pallas.1} parent=43 // pred_fallthru
            _
          %1795 = vnop
        $region44: #{self_attention_pallas.1} parent=35 // pred_fallthru
          _
      $region36: #{self_attention_pallas.1} parent=5 // pred_fallthru
        _
      %p1796 = scmp.le.s32.totalorder 2, %s11
      // Predicated region
      $region79: #{self_attention_pallas.1} parent=5 // pred_check
        %p1797 = pneg %p1796
      $region80: #{self_attention_pallas.1} parent=5 // pred_check_branch
        %1799 = sbr.rel (%p1797) target = $region82
      $region81: #{self_attention_pallas.1} parent=5 // pred_region
        %s1800 = ssub.s32 %s11, 2
        // Predicated region
        $region83: #{self_attention_pallas.1} parent=81 // pred_check
          %p1801 = pneg %p143
        $region84: #{self_attention_pallas.1} parent=81 // pred_check_branch
          %1803 = sbr.rel (%p1801) target = $region86
        $region85: #{self_attention_pallas.1} parent=81 // pred_region
          %s1804 = sand.u32 %s128, 1
          %s1805 = sand.u32 %s128, 1
          %s1806 = smul.addr %s1805, 128
          %s1807 = scalar_lea.vmem [#allocation5], %s1806
        $region86: #{self_attention_pallas.1} parent=81 // pred_fallthru
          _
      $region82: #{self_attention_pallas.1} parent=5 // pred_fallthru
        _
    $region6: #{self_attention_pallas.1} parent=1 // loop_footer
      %s15 = sadd.s32 1, %s11
    $region7: #{self_attention_pallas.1} parent=1 // loop_footer_branch
      %10 = sbr.rel target = $region3
    $region8: #{self_attention_pallas.1} parent=1 // loop_exit
      _

</llo_original>
